<compile_context>
chip_gen: v6e
topology: v6e:2x2x1
jax: 0.10.0
libtpu: 0.0.40
codegen_flags: <defaults>
</compile_context>

<pallas_src>
import numpy as np
import jax
import jax.numpy as jnp
from jax.experimental import pallas as pl
from jax.experimental.pallas import tpu as pltpu

# ---------------- tiny synthetic T5 config ----------------
VOCAB = 64
D_MODEL = 32
N_HEADS = 4
D_KV = 8
INNER = N_HEADS * D_KV          # 32
D_FF = 64
NUM_BUCKETS = 8
MAX_DISTANCE = 16
EPS = 1e-6
NEG_INF = -1e9


# ---------------- shared in-kernel helpers ----------------
def _rms_bf16(x, g):
    """T5 RMSNorm (no mean subtraction, no bias) -> bf16 for the MXU."""
    x = x.astype(jnp.float32)
    var = jnp.mean(x * x, axis=-1, keepdims=True)
    return (x * jax.lax.rsqrt(var + EPS) * g).astype(jnp.bfloat16)


def _gated_ffn(x, g, wi, wo_ff):
    """RMSNorm + gated-GELU FFN + residual (all operands already in VMEM)."""
    n = _rms_bf16(x, g)
    h = jnp.dot(n, wi, preferred_element_type=jnp.float32)        # (M, 2F)
    F = wo_ff.shape[0]
    hg = jax.nn.gelu(h[:, :F], approximate=True) * h[:, F:]
    return x + jnp.dot(hg.astype(jnp.bfloat16), wo_ff,
                       preferred_element_type=jnp.float32)


def _proj_residual(ctx, wo, resid):
    """Attention output projection fused with the residual add."""
    return resid + jnp.dot(ctx.astype(jnp.bfloat16), wo,
                           preferred_element_type=jnp.float32)


# ---------------- Pallas kernels ----------------
def _ln_matmul_kernel(x_ref, g_ref, w_ref, o_ref):
    # fused RMSNorm + projection (weights already bf16, f32 accumulation)
    n = _rms_bf16(x_ref[...], g_ref[...])
    o_ref[...] = jnp.dot(n, w_ref[...], preferred_element_type=jnp.float32)


def ln_matmul(x2d, g, w_bf16):
    M, D = x2d.shape
    N = w_bf16.shape[1]
    return pl.pallas_call(
        _ln_matmul_kernel,
        out_shape=jax.ShapeDtypeStruct((M, N), jnp.float32),
    )(x2d, g.reshape(1, D), w_bf16)


def _attn_kernel(q_ref, k_ref, v_ref, pos_ref, msk_ref, o_ref):
    # q/k/v: (B*H, L, dk); pos: (1, H, Lq, Lk); msk: (B, 1, Lq, Lk)
    # NOTE: T5 attention has NO 1/sqrt(d_kv) scaling (folded into init).
    q = q_ref[...].astype(jnp.bfloat16)
    k = k_ref[...].astype(jnp.bfloat16)
    v = v_ref[...].astype(jnp.bfloat16)
    s = jnp.einsum('bqd,bkd->bqk', q, k, preferred_element_type=jnp.float32)
    BH, Lq, Lk = s.shape
    bias = (msk_ref[...] + pos_ref[...]).reshape(BH, Lq, Lk)   # broadcast in VMEM
    s = s + bias
    s = s - jnp.max(s, axis=-1, keepdims=True)
    p = jnp.exp(s)
    p = p * pl.reciprocal(jnp.sum(p, axis=-1, keepdims=True), approx=True)
    o_ref[...] = jnp.einsum('bqk,bkd->bqd', p.astype(jnp.bfloat16), v,
                            preferred_element_type=jnp.float32)


def attention_core(q, k, v, pos_bias, mask_bias):
    BH, Lq, dk = q.shape
    return pl.pallas_call(
        _attn_kernel,
        out_shape=jax.ShapeDtypeStruct((BH, Lq, dk), jnp.float32),
    )(q, k, v, pos_bias, mask_bias)


def _enc_tail_kernel(ctx_ref, wo_ref, res_ref, g_ffn_ref, wi_ref, wff_o_ref,
                     g_fin_ref, wkv_ref, kv_ref):
    # attn-out projection + residual + FFN block + encoder-final RMSNorm +
    # cross-attention K|V projection, all fused; encoder hidden state never
    # leaves VMEM.
    x = _proj_residual(ctx_ref[...], wo_ref[...], res_ref[...])
    x = _gated_ffn(x, g_ffn_ref[...], wi_ref[...], wff_o_ref[...])
    nf = _rms_bf16(x, g_fin_ref[...])
    kv_ref[...] = jnp.dot(nf, wkv_ref[...], preferred_element_type=jnp.float32)


def enc_tail(ctx2d, wo, resid2d, g_ffn, wi, wff_o, g_fin, wkv):
    M, D = resid2d.shape
    N = wkv.shape[1]
    return pl.pallas_call(
        _enc_tail_kernel,
        out_shape=jax.ShapeDtypeStruct((M, N), jnp.float32),
    )(ctx2d, wo, resid2d, g_ffn.reshape(1, D), wi, wff_o,
      g_fin.reshape(1, D), wkv)


def _dec_sa_tail_kernel(ctx_ref, wo_ref, res_ref, g2_ref, wq_ref,
                        x_ref, q_ref):
    # self-attn-out projection + residual + RMSNorm + cross-attn Q projection.
    x = _proj_residual(ctx_ref[...], wo_ref[...], res_ref[...])
    x_ref[...] = x
    n = _rms_bf16(x, g2_ref[...])
    q_ref[...] = jnp.dot(n, wq_ref[...], preferred_element_type=jnp.float32)


def dec_sa_tail(ctx2d, wo, resid2d, g2, wq):
    M, D = resid2d.shape
    Nq = wq.shape[1]
    return pl.pallas_call(
        _dec_sa_tail_kernel,
        out_shape=(jax.ShapeDtypeStruct((M, D), jnp.float32),
                   jax.ShapeDtypeStruct((M, Nq), jnp.float32)),
    )(ctx2d, wo, resid2d, g2.reshape(1, D), wq)


def _dec_tail_ce_kernel(ctx_ref, wo_ref, res_ref, g3_ref, wi_ref, wff_o_ref,
                        g_fin_ref, lm_ref, lab_ref, nll_ref, cnt_ref):
    # cross-attn-out projection + residual + FFN block + decoder-final RMSNorm
    # + lm_head matmul + cross-entropy; logits never hit HBM.
    x = _proj_residual(ctx_ref[...], wo_ref[...], res_ref[...])
    x = _gated_ffn(x, g3_ref[...], wi_ref[...], wff_o_ref[...])
    nf = _rms_bf16(x, g_fin_ref[...])
    logits = jnp.dot(nf, lm_ref[...], preferred_element_type=jnp.float32)  # (M, V)
    labels = lab_ref[...]                                                  # (M, 1)
    m = jnp.max(logits, axis=-1, keepdims=True)
    lse = jnp.log(jnp.sum(jnp.exp(logits - m), axis=-1, keepdims=True)) + m
    col = jax.lax.broadcasted_iota(jnp.int32, logits.shape, 1)
    onehot = (col == labels).astype(jnp.float32)
    tgt = jnp.sum(logits * onehot, axis=-1, keepdims=True)
    valid = (labels != -100).astype(jnp.float32)
    nll_ref[0, 0] = jnp.sum((lse - tgt) * valid)
    cnt_ref[0, 0] = jnp.sum(valid)


def dec_tail_ce(ctx2d, wo, resid2d, g3, wi, wff_o, g_fin, lm_bf16, labels2d):
    M, D = resid2d.shape
    nll, cnt = pl.pallas_call(
        _dec_tail_ce_kernel,
        out_shape=(jax.ShapeDtypeStruct((1, 1), jnp.float32),
                   jax.ShapeDtypeStruct((1, 1), jnp.float32)),
        out_specs=(pl.BlockSpec(memory_space=pltpu.MemorySpace.SMEM),
                   pl.BlockSpec(memory_space=pltpu.MemorySpace.SMEM)),
    )(ctx2d, wo, resid2d, g3.reshape(1, D), wi, wff_o,
      g_fin.reshape(1, D), lm_bf16, labels2d)
    return nll[0, 0], cnt[0, 0]


# ---------------- plain-JAX glue (position buckets, head reshapes, params) ----------------
def _relative_position_bucket(relative_position, bidirectional, num_buckets, max_distance):
    relative_buckets = jnp.zeros_like(relative_position)
    if bidirectional:
        num_buckets //= 2
        relative_buckets += (relative_position > 0).astype(jnp.int32) * num_buckets
        relative_position = jnp.abs(relative_position)
    else:
        relative_position = -jnp.minimum(relative_position, 0)
    max_exact = num_buckets // 2
    is_small = relative_position < max_exact
    rp_safe = jnp.maximum(relative_position, 1).astype(jnp.float32)
    rel_if_large = max_exact + (
        jnp.log(rp_safe / max_exact) / np.log(max_distance / max_exact) * (num_buckets - max_exact)
    ).astype(jnp.int32)
    rel_if_large = jnp.minimum(rel_if_large, num_buckets - 1)
    relative_buckets += jnp.where(is_small, relative_position, rel_if_large)
    return relative_buckets


def compute_position_bias(rel_bias_table, Lq, Lk, bidirectional):
    ctx = jnp.arange(Lq)[:, None]
    mem = jnp.arange(Lk)[None, :]
    buckets = _relative_position_bucket(mem - ctx, bidirectional, NUM_BUCKETS, MAX_DISTANCE)
    bias = rel_bias_table[buckets]                 # (Lq, Lk, H)
    return jnp.transpose(bias, (2, 0, 1))[None]    # (1, H, Lq, Lk)


def split_heads(x2d, B, L):
    # (B*L, INNER) -> (B*H, L, D_KV)
    return x2d.reshape(B, L, N_HEADS, D_KV).transpose(0, 2, 1, 3).reshape(B * N_HEADS, L, D_KV)


def merge_heads(ctx, B, L):
    # (B*H, L, D_KV) -> (B*L, INNER)
    return ctx.reshape(B, N_HEADS, L, D_KV).transpose(0, 2, 1, 3).reshape(B * L, INNER)


def init_params(key):
    keys = iter(jax.random.split(key, 32))
    nrm = lambda k, shape, s=0.05: jax.random.normal(k, shape, jnp.float32) * s
    p = {"embed": nrm(next(keys), (VOCAB, D_MODEL), 1.0),
         "lm_head": nrm(next(keys), (D_MODEL, VOCAB)),
         "enc_rel_bias": nrm(next(keys), (NUM_BUCKETS, N_HEADS)),
         "dec_rel_bias": nrm(next(keys), (NUM_BUCKETS, N_HEADS))}
    for pre in ["enc", "dec_sa", "dec_ca"]:
        for nm in ["q", "k", "v"]:
            p[f"{pre}_{nm}"] = nrm(next(keys), (D_MODEL, INNER))
        p[f"{pre}_o"] = nrm(next(keys), (INNER, D_MODEL))
    for pre in ["enc", "dec"]:
        p[f"{pre}_wi0"] = nrm(next(keys), (D_MODEL, D_FF))
        p[f"{pre}_wi1"] = nrm(next(keys), (D_MODEL, D_FF))
        p[f"{pre}_wo"] = nrm(next(keys), (D_FF, D_MODEL))
    for nm in ["enc_ln1", "enc_ln2", "enc_final_ln",
               "dec_ln1", "dec_ln2", "dec_ln3", "dec_final_ln"]:
        p[nm] = jnp.ones((D_MODEL,), jnp.float32)
    return p


def t5_loss(params, input_ids, attention_mask, labels):
    B, LS = input_ids.shape
    LT = labels.shape[1]
    bf16 = jnp.bfloat16

    # ---- fused / bf16-cast weights (MXU operands; accumulation stays f32) ----
    enc_wqkv = jnp.concatenate([params["enc_q"], params["enc_k"], params["enc_v"]], 1).astype(bf16)
    dec_sa_wqkv = jnp.concatenate(
        [params["dec_sa_q"], params["dec_sa_k"], params["dec_sa_v"]], 1).astype(bf16)
    dec_ca_wq = params["dec_ca_q"].astype(bf16)
    dec_ca_wkv = jnp.concatenate([params["dec_ca_k"], params["dec_ca_v"]], 1).astype(bf16)
    enc_wo, dec_sa_wo, dec_ca_wo = (params["enc_o"].astype(bf16),
                                    params["dec_sa_o"].astype(bf16),
                                    params["dec_ca_o"].astype(bf16))
    enc_wi = jnp.concatenate([params["enc_wi0"], params["enc_wi1"]], 1).astype(bf16)
    dec_wi = jnp.concatenate([params["dec_wi0"], params["dec_wi1"]], 1).astype(bf16)
    enc_wff_o, dec_wff_o = params["enc_wo"].astype(bf16), params["dec_wo"].astype(bf16)
    lm_head = params["lm_head"].astype(bf16)

    # ---- encoder ----
    x = params["embed"][input_ids]                                   # (B, LS, D)
    hf = x.reshape(B * LS, D_MODEL)

    enc_mask = (1.0 - attention_mask)[:, None, None, :] * NEG_INF    # (B,1,1,LS) additive
    enc_mask_self = jnp.broadcast_to(enc_mask, (B, 1, LS, LS))
    enc_pos = compute_position_bias(params["enc_rel_bias"], LS, LS, bidirectional=True)

    qkv = ln_matmul(hf, params["enc_ln1"], enc_wqkv)                 # (B*LS, 3*INNER)
    q = split_heads(qkv[:, :INNER], B, LS)
    k = split_heads(qkv[:, INNER:2 * INNER], B, LS)
    v = split_heads(qkv[:, 2 * INNER:], B, LS)
    ctx = attention_core(q, k, v, enc_pos, enc_mask_self)

    # attn-out proj + residual + FFN + encoder-final RMSNorm + cross-attn K|V
    # projection, all in one kernel (encoder hidden state never leaves VMEM).
    kv = enc_tail(merge_heads(ctx, B, LS), enc_wo, hf,
                  params["enc_ln2"], enc_wi, enc_wff_o,
                  params["enc_final_ln"], dec_ca_wkv)                # (B*LS, 2*INNER)
    k_ca = split_heads(kv[:, :INNER], B, LS)
    v_ca = split_heads(kv[:, INNER:], B, LS)

    # ---- decoder inputs: shift labels right (decoder_start_token_id = 0) ----
    dec_ids = jnp.concatenate([jnp.zeros((B, 1), labels.dtype), labels[:, :-1]], axis=1)
    dec_ids = jnp.where(dec_ids == -100, 0, dec_ids)
    gf = params["embed"][dec_ids].reshape(B * LT, D_MODEL)

    causal = jnp.where(jnp.arange(LT)[:, None] >= jnp.arange(LT)[None, :], 0.0, NEG_INF)
    dec_pos = compute_position_bias(params["dec_rel_bias"], LT, LT, bidirectional=False) \
        + causal[None, None]                                          # (1,H,LT,LT)
    zero_mask = jnp.zeros((B, 1, LT, LT), jnp.float32)

    # decoder self-attention
    qkv = ln_matmul(gf, params["dec_ln1"], dec_sa_wqkv)
    q = split_heads(qkv[:, :INNER], B, LT)
    k = split_heads(qkv[:, INNER:2 * INNER], B, LT)
    v = split_heads(qkv[:, 2 * INNER:], B, LT)
    ctx = attention_core(q, k, v, dec_pos, zero_mask)

    # self-attn-out proj + residual + RMSNorm + cross-attn Q projection fused.
    gf, q_ca2d = dec_sa_tail(merge_heads(ctx, B, LT), dec_sa_wo, gf,
                             params["dec_ln2"], dec_ca_wq)
    q_ca = split_heads(q_ca2d, B, LT)

    # decoder cross-attention (T5: no position bias on cross-attn)
    cross_pos = jnp.zeros((1, N_HEADS, LT, LS), jnp.float32)
    cross_mask = jnp.broadcast_to(enc_mask, (B, 1, LT, LS))
    ctx = attention_core(q_ca, k_ca, v_ca, cross_pos, cross_mask)

    # cross-attn-out proj + residual + FFN + decoder-final RMSNorm + lm_head
    # (untied, flan-t5 -> no d_model**-0.5 scaling) + cross-entropy, fused.
    nll, cnt = dec_tail_ce(merge_heads(ctx, B, LT), dec_ca_wo, gf,
                           params["dec_ln3"], dec_wi, dec_wff_o,
                           params["dec_final_ln"], lm_head,
                           labels.reshape(B * LT, 1).astype(jnp.int32))
    return nll / jnp.maximum(cnt, 1.0)


# TODO(synk): the HF module also accepts `inputs_embeds`; this script exercises the
# `input_ids` path only (embeds path would just skip the embedding lookup).
# TODO(synk): at real flan-t5 sizes, re-introduce M/N/K tiling grids (vocab-tiled
# lm_head with K-accumulation, >=128-row token tiles, "parallel" axes for v7x's
# 2 TensorCores); the grid-free whole-array-in-VMEM form is right only for toy shapes.

if __name__ == "__main__":
    key = jax.random.PRNGKey(0)
    kp, ki, kl = jax.random.split(key, 3)
    params = init_params(kp)

    B, LS, LT = 2, 8, 8
    input_ids = jax.random.randint(ki, (B, LS), 0, VOCAB, dtype=jnp.int32)
    attention_mask = jnp.ones((B, LS), jnp.float32)
    labels = jax.random.randint(kl, (B, LT), 0, VOCAB, dtype=jnp.int32)
    labels = labels.at[:, -2:].set(-100)   # ignored positions, like padded label tokens

    loss_fn = jax.jit(t5_loss)
    loss = loss_fn(params, input_ids, attention_mask, labels)
    jax.block_until_ready(loss)
    assert jnp.isfinite(loss), f"loss not finite: {loss}"
    print("KERNEL_OK")
</pallas_src>

<mosaic_0001>
module attributes {stable_mosaic.version = 11 : i64} {
  func.func @_ln_matmul_kernel(%arg0: memref<16x32xf32, #tpu.memory_space<vmem>>, %arg1: memref<1x32xf32, #tpu.memory_space<vmem>>, %arg2: memref<32x96xbf16, #tpu.memory_space<vmem>>, %arg3: memref<16x96xf32, #tpu.memory_space<vmem>>) attributes {dimension_semantics = [], scalar_prefetch = 0 : i64, scratch_operands = 0 : i64, tpu.core_type = #tpu.core_type<tc>} {
    %c0 = arith.constant 0 : index
    %c0_0 = arith.constant 0 : index
    %0 = vector.load %arg0[%c0, %c0_0] : memref<16x32xf32, #tpu.memory_space<vmem>>, vector<16x32xf32>
    %c0_1 = arith.constant 0 : index
    %c0_2 = arith.constant 0 : index
    %1 = vector.load %arg1[%c0_1, %c0_2] : memref<1x32xf32, #tpu.memory_space<vmem>>, vector<1x32xf32>
    %2 = arith.mulf %0, %0 : vector<16x32xf32>
    %cst = arith.constant dense<0.000000e+00> : vector<16xf32>
    %3 = vector.multi_reduction <add>, %2, %cst [1] : vector<16x32xf32> to vector<16xf32>
    %4 = vector.shape_cast %3 : vector<16xf32> to vector<16x1xf32>
    %cst_3 = arith.constant 3.200000e+01 : f32
    %5 = vector.broadcast %cst_3 : f32 to vector<16x1xf32>
    %6 = arith.divf %4, %5 : vector<16x1xf32>
    %cst_4 = arith.constant 9.99999997E-7 : f32
    %7 = vector.broadcast %cst_4 : f32 to vector<16x1xf32>
    %8 = arith.addf %6, %7 : vector<16x1xf32>
    %9 = math.rsqrt %8 : vector<16x1xf32>
    %10 = vector.broadcast %9 : vector<16x1xf32> to vector<16x32xf32>
    %11 = arith.mulf %0, %10 : vector<16x32xf32>
    %12 = vector.broadcast %1 : vector<1x32xf32> to vector<16x32xf32>
    %13 = arith.mulf %11, %12 : vector<16x32xf32>
    %14 = arith.truncf %13 : vector<16x32xf32> to vector<16x32xbf16>
    %c0_5 = arith.constant 0 : index
    %c0_6 = arith.constant 0 : index
    %15 = vector.load %arg2[%c0_5, %c0_6] : memref<32x96xbf16, #tpu.memory_space<vmem>>, vector<32x96xbf16>
    %cst_7 = arith.constant dense<0.000000e+00> : vector<16x96xf32>
    %16 = tpu.matmul %14, %15, %cst_7 {dimension_numbers = #tpu.dot_dimension_numbers<[1], [0], [0], [1], [0, 0, 1, 1], [], []>} : vector<16x32xbf16>, vector<32x96xbf16>, vector<16x96xf32> -> vector<16x96xf32>
    %c0_8 = arith.constant 0 : index
    %c0_9 = arith.constant 0 : index
    %17 = vector.load %arg3[%c0_8, %c0_9] : memref<16x96xf32, #tpu.memory_space<vmem>>, vector<16x96xf32>
    tpu.vector_store %arg3[%c0_8, %c0_9], %16 {strides = array<i32>} : memref<16x96xf32, #tpu.memory_space<vmem>>, vector<16x96xf32>,
    return
  }
}

module attributes {stable_mosaic.version = 11 : i64} {
  func.func @_attn_kernel(%arg0: memref<8x8x8xf32, #tpu.memory_space<vmem>>, %arg1: memref<8x8x8xf32, #tpu.memory_space<vmem>>, %arg2: memref<8x8x8xf32, #tpu.memory_space<vmem>>, %arg3: memref<1x4x8x8xf32, #tpu.memory_space<vmem>>, %arg4: memref<2x1x8x8xf32, #tpu.memory_space<vmem>>, %arg5: memref<8x8x8xf32, #tpu.memory_space<vmem>>) attributes {dimension_semantics = [], scalar_prefetch = 0 : i64, scratch_operands = 0 : i64, tpu.core_type = #tpu.core_type<tc>} {
    %c0 = arith.constant 0 : index
    %c0_0 = arith.constant 0 : index
    %c0_1 = arith.constant 0 : index
    %0 = vector.load %arg0[%c0, %c0_0, %c0_1] : memref<8x8x8xf32, #tpu.memory_space<vmem>>, vector<8x8x8xf32>
    %1 = arith.truncf %0 : vector<8x8x8xf32> to vector<8x8x8xbf16>
    %c0_2 = arith.constant 0 : index
    %c0_3 = arith.constant 0 : index
    %c0_4 = arith.constant 0 : index
    %2 = vector.load %arg1[%c0_2, %c0_3, %c0_4] : memref<8x8x8xf32, #tpu.memory_space<vmem>>, vector<8x8x8xf32>
    %3 = arith.truncf %2 : vector<8x8x8xf32> to vector<8x8x8xbf16>
    %c0_5 = arith.constant 0 : index
    %c0_6 = arith.constant 0 : index
    %c0_7 = arith.constant 0 : index
    %4 = vector.load %arg2[%c0_5, %c0_6, %c0_7] : memref<8x8x8xf32, #tpu.memory_space<vmem>>, vector<8x8x8xf32>
    %5 = arith.truncf %4 : vector<8x8x8xf32> to vector<8x8x8xbf16>
    "tpu.trace_start"() <{level = 10 : i32, message = "bqd,bkd->bqk"}> : () -> ()
    %cst = arith.constant dense<0.000000e+00> : vector<8x8x8xf32>
    %6 = tpu.matmul %1, %3, %cst {dimension_numbers = #tpu.dot_dimension_numbers<[2], [2], [1], [1], [0, 0, 0, 1, 1, 1], [0], [0]>} : vector<8x8x8xbf16>, vector<8x8x8xbf16>, vector<8x8x8xf32> -> vector<8x8x8xf32>
    "tpu.trace_stop"() : () -> ()
    %c0_8 = arith.constant 0 : index
    %c0_9 = arith.constant 0 : index
    %c0_10 = arith.constant 0 : index
    %c0_11 = arith.constant 0 : index
    %7 = vector.load %arg4[%c0_8, %c0_9, %c0_10, %c0_11] : memref<2x1x8x8xf32, #tpu.memory_space<vmem>>, vector<2x1x8x8xf32>
    %c0_12 = arith.constant 0 : index
    %c0_13 = arith.constant 0 : index
    %c0_14 = arith.constant 0 : index
    %c0_15 = arith.constant 0 : index
    %8 = vector.load %arg3[%c0_12, %c0_13, %c0_14, %c0_15] : memref<1x4x8x8xf32, #tpu.memory_space<vmem>>, vector<1x4x8x8xf32>
    %9 = vector.broadcast %7 : vector<2x1x8x8xf32> to vector<2x4x8x8xf32>
    %10 = vector.broadcast %8 : vector<1x4x8x8xf32> to vector<2x4x8x8xf32>
    %11 = arith.addf %9, %10 : vector<2x4x8x8xf32>
    %12 = vector.shape_cast %11 : vector<2x4x8x8xf32> to vector<8x8x8xf32>
    %13 = arith.addf %6, %12 : vector<8x8x8xf32>
    %cst_16 = arith.constant dense<0xFF800000> : vector<8x8xf32>
    %14 = vector.multi_reduction <maximumf>, %13, %cst_16 [2] : vector<8x8x8xf32> to vector<8x8xf32>
    %15 = vector.shape_cast %14 : vector<8x8xf32> to vector<8x8x1xf32>
    %16 = vector.broadcast %15 : vector<8x8x1xf32> to vector<8x8x8xf32>
    %17 = arith.subf %13, %16 : vector<8x8x8xf32>
    %18 = math.exp %17 : vector<8x8x8xf32>
    %cst_17 = arith.constant dense<0.000000e+00> : vector<8x8xf32>
    %19 = vector.multi_reduction <add>, %18, %cst_17 [2] : vector<8x8x8xf32> to vector<8x8xf32>
    %20 = vector.shape_cast %19 : vector<8x8xf32> to vector<8x8x1xf32>
    %21 = tpu.reciprocal %20 {approx = true} : vector<8x8x1xf32> -> vector<8x8x1xf32>
    %22 = vector.broadcast %21 : vector<8x8x1xf32> to vector<8x8x8xf32>
    %23 = arith.mulf %18, %22 : vector<8x8x8xf32>
    %24 = arith.truncf %23 : vector<8x8x8xf32> to vector<8x8x8xbf16>
    "tpu.trace_start"() <{level = 10 : i32, message = "bqk,bkd->bqd"}> : () -> ()
    %cst_18 = arith.constant dense<0.000000e+00> : vector<8x8x8xf32>
    %25 = tpu.matmul %24, %5, %cst_18 {dimension_numbers = #tpu.dot_dimension_numbers<[2], [1], [1], [2], [0, 0, 0, 1, 1, 2], [0], [0]>} : vector<8x8x8xbf16>, vector<8x8x8xbf16>, vector<8x8x8xf32> -> vector<8x8x8xf32>
    "tpu.trace_stop"() : () -> ()
    %c0_19 = arith.constant 0 : index
    %c0_20 = arith.constant 0 : index
    %c0_21 = arith.constant 0 : index
    %26 = vector.load %arg5[%c0_19, %c0_20, %c0_21] : memref<8x8x8xf32, #tpu.memory_space<vmem>>, vector<8x8x8xf32>
    tpu.vector_store %arg5[%c0_19, %c0_20, %c0_21], %25 {strides = array<i32>} : memref<8x8x8xf32, #tpu.memory_space<vmem>>, vector<8x8x8xf32>,
    return
  }
}

module attributes {stable_mosaic.version = 11 : i64} {
  func.func @_dec_sa_tail_kernel(%arg0: memref<16x32xf32, #tpu.memory_space<vmem>>, %arg1: memref<32x32xbf16, #tpu.memory_space<vmem>>, %arg2: memref<16x32xf32, #tpu.memory_space<vmem>>, %arg3: memref<1x32xf32, #tpu.memory_space<vmem>>, %arg4: memref<32x32xbf16, #tpu.memory_space<vmem>>, %arg5: memref<16x32xf32, #tpu.memory_space<vmem>>, %arg6: memref<16x32xf32, #tpu.memory_space<vmem>>) attributes {dimension_semantics = [], scalar_prefetch = 0 : i64, scratch_operands = 0 : i64, tpu.core_type = #tpu.core_type<tc>} {
    %c0 = arith.constant 0 : index
    %c0_0 = arith.constant 0 : index
    %0 = vector.load %arg0[%c0, %c0_0] : memref<16x32xf32, #tpu.memory_space<vmem>>, vector<16x32xf32>
    %c0_1 = arith.constant 0 : index
    %c0_2 = arith.constant 0 : index
    %1 = vector.load %arg1[%c0_1, %c0_2] : memref<32x32xbf16, #tpu.memory_space<vmem>>, vector<32x32xbf16>
    %c0_3 = arith.constant 0 : index
    %c0_4 = arith.constant 0 : index
    %2 = vector.load %arg2[%c0_3, %c0_4] : memref<16x32xf32, #tpu.memory_space<vmem>>, vector<16x32xf32>
    %3 = arith.truncf %0 : vector<16x32xf32> to vector<16x32xbf16>
    %cst = arith.constant dense<0.000000e+00> : vector<16x32xf32>
    %4 = tpu.matmul %3, %1, %cst {dimension_numbers = #tpu.dot_dimension_numbers<[1], [0], [0], [1], [0, 0, 1, 1], [], []>} : vector<16x32xbf16>, vector<32x32xbf16>, vector<16x32xf32> -> vector<16x32xf32>
    %5 = arith.addf %2, %4 : vector<16x32xf32>
    %c0_5 = arith.constant 0 : index
    %c0_6 = arith.constant 0 : index
    %6 = vector.load %arg5[%c0_5, %c0_6] : memref<16x32xf32, #tpu.memory_space<vmem>>, vector<16x32xf32>
    tpu.vector_store %arg5[%c0_5, %c0_6], %5 {strides = array<i32>} : memref<16x32xf32, #tpu.memory_space<vmem>>, vector<16x32xf32>,
    %c0_7 = arith.constant 0 : index
    %c0_8 = arith.constant 0 : index
    %7 = vector.load %arg3[%c0_7, %c0_8] : memref<1x32xf32, #tpu.memory_space<vmem>>, vector<1x32xf32>
    %8 = arith.mulf %5, %5 : vector<16x32xf32>
    %cst_9 = arith.constant dense<0.000000e+00> : vector<16xf32>
    %9 = vector.multi_reduction <add>, %8, %cst_9 [1] : vector<16x32xf32> to vector<16xf32>
    %10 = vector.shape_cast %9 : vector<16xf32> to vector<16x1xf32>
    %cst_10 = arith.constant 3.200000e+01 : f32
    %11 = vector.broadcast %cst_10 : f32 to vector<16x1xf32>
    %12 = arith.divf %10, %11 : vector<16x1xf32>
    %cst_11 = arith.constant 9.99999997E-7 : f32
    %13 = vector.broadcast %cst_11 : f32 to vector<16x1xf32>
    %14 = arith.addf %12, %13 : vector<16x1xf32>
    %15 = math.rsqrt %14 : vector<16x1xf32>
    %16 = vector.broadcast %15 : vector<16x1xf32> to vector<16x32xf32>
    %17 = arith.mulf %5, %16 : vector<16x32xf32>
    %18 = vector.broadcast %7 : vector<1x32xf32> to vector<16x32xf32>
    %19 = arith.mulf %17, %18 : vector<16x32xf32>
    %20 = arith.truncf %19 : vector<16x32xf32> to vector<16x32xbf16>
    %c0_12 = arith.constant 0 : index
    %c0_13 = arith.constant 0 : index
    %21 = vector.load %arg4[%c0_12, %c0_13] : memref<32x32xbf16, #tpu.memory_space<vmem>>, vector<32x32xbf16>
    %cst_14 = arith.constant dense<0.000000e+00> : vector<16x32xf32>
    %22 = tpu.matmul %20, %21, %cst_14 {dimension_numbers = #tpu.dot_dimension_numbers<[1], [0], [0], [1], [0, 0, 1, 1], [], []>} : vector<16x32xbf16>, vector<32x32xbf16>, vector<16x32xf32> -> vector<16x32xf32>
    %c0_15 = arith.constant 0 : index
    %c0_16 = arith.constant 0 : index
    %23 = vector.load %arg6[%c0_15, %c0_16] : memref<16x32xf32, #tpu.memory_space<vmem>>, vector<16x32xf32>
    tpu.vector_store %arg6[%c0_15, %c0_16], %22 {strides = array<i32>} : memref<16x32xf32, #tpu.memory_space<vmem>>, vector<16x32xf32>,
    return
  }
}

module attributes {stable_mosaic.version = 11 : i64} {
  func.func @_enc_tail_kernel(%arg0: memref<16x32xf32, #tpu.memory_space<vmem>>, %arg1: memref<32x32xbf16, #tpu.memory_space<vmem>>, %arg2: memref<16x32xf32, #tpu.memory_space<vmem>>, %arg3: memref<1x32xf32, #tpu.memory_space<vmem>>, %arg4: memref<32x128xbf16, #tpu.memory_space<vmem>>, %arg5: memref<64x32xbf16, #tpu.memory_space<vmem>>, %arg6: memref<1x32xf32, #tpu.memory_space<vmem>>, %arg7: memref<32x64xbf16, #tpu.memory_space<vmem>>, %arg8: memref<16x64xf32, #tpu.memory_space<vmem>>) attributes {dimension_semantics = [], scalar_prefetch = 0 : i64, scratch_operands = 0 : i64, tpu.core_type = #tpu.core_type<tc>} {
    %c0 = arith.constant 0 : index
    %c0_0 = arith.constant 0 : index
    %0 = vector.load %arg0[%c0, %c0_0] : memref<16x32xf32, #tpu.memory_space<vmem>>, vector<16x32xf32>
    %c0_1 = arith.constant 0 : index
    %c0_2 = arith.constant 0 : index
    %1 = vector.load %arg1[%c0_1, %c0_2] : memref<32x32xbf16, #tpu.memory_space<vmem>>, vector<32x32xbf16>
    %c0_3 = arith.constant 0 : index
    %c0_4 = arith.constant 0 : index
    %2 = vector.load %arg2[%c0_3, %c0_4] : memref<16x32xf32, #tpu.memory_space<vmem>>, vector<16x32xf32>
    %3 = arith.truncf %0 : vector<16x32xf32> to vector<16x32xbf16>
    %cst = arith.constant dense<0.000000e+00> : vector<16x32xf32>
    %4 = tpu.matmul %3, %1, %cst {dimension_numbers = #tpu.dot_dimension_numbers<[1], [0], [0], [1], [0, 0, 1, 1], [], []>} : vector<16x32xbf16>, vector<32x32xbf16>, vector<16x32xf32> -> vector<16x32xf32>
    %5 = arith.addf %2, %4 : vector<16x32xf32>
    %c0_5 = arith.constant 0 : index
    %c0_6 = arith.constant 0 : index
    %6 = vector.load %arg3[%c0_5, %c0_6] : memref<1x32xf32, #tpu.memory_space<vmem>>, vector<1x32xf32>
    %c0_7 = arith.constant 0 : index
    %c0_8 = arith.constant 0 : index
    %7 = vector.load %arg4[%c0_7, %c0_8] : memref<32x128xbf16, #tpu.memory_space<vmem>>, vector<32x128xbf16>
    %c0_9 = arith.constant 0 : index
    %c0_10 = arith.constant 0 : index
    %8 = vector.load %arg5[%c0_9, %c0_10] : memref<64x32xbf16, #tpu.memory_space<vmem>>, vector<64x32xbf16>
    %9 = arith.mulf %5, %5 : vector<16x32xf32>
    %cst_11 = arith.constant dense<0.000000e+00> : vector<16xf32>
    %10 = vector.multi_reduction <add>, %9, %cst_11 [1] : vector<16x32xf32> to vector<16xf32>
    %11 = vector.shape_cast %10 : vector<16xf32> to vector<16x1xf32>
    %cst_12 = arith.constant 3.200000e+01 : f32
    %12 = vector.broadcast %cst_12 : f32 to vector<16x1xf32>
    %13 = arith.divf %11, %12 : vector<16x1xf32>
    %cst_13 = arith.constant 9.99999997E-7 : f32
    %14 = vector.broadcast %cst_13 : f32 to vector<16x1xf32>
    %15 = arith.addf %13, %14 : vector<16x1xf32>
    %16 = math.rsqrt %15 : vector<16x1xf32>
    %17 = vector.broadcast %16 : vector<16x1xf32> to vector<16x32xf32>
    %18 = arith.mulf %5, %17 : vector<16x32xf32>
    %19 = vector.broadcast %6 : vector<1x32xf32> to vector<16x32xf32>
    %20 = arith.mulf %18, %19 : vector<16x32xf32>
    %21 = arith.truncf %20 : vector<16x32xf32> to vector<16x32xbf16>
    %cst_14 = arith.constant dense<0.000000e+00> : vector<16x128xf32>
    %22 = tpu.matmul %21, %7, %cst_14 {dimension_numbers = #tpu.dot_dimension_numbers<[1], [0], [0], [1], [0, 0, 1, 1], [], []>} : vector<16x32xbf16>, vector<32x128xbf16>, vector<16x128xf32> -> vector<16x128xf32>
    %23 = vector.extract_strided_slice %22 {offsets = [0, 0], sizes = [16, 64], strides = [1, 1]} : vector<16x128xf32> to vector<16x64xf32>
    %24 = arith.mulf %23, %23 : vector<16x64xf32>
    %25 = arith.mulf %23, %24 : vector<16x64xf32>
    %cst_15 = arith.constant 4.471500e-02 : f32
    %26 = vector.broadcast %cst_15 : f32 to vector<16x64xf32>
    %27 = arith.mulf %26, %25 : vector<16x64xf32>
    %28 = arith.addf %23, %27 : vector<16x64xf32>
    %cst_16 = arith.constant 0.797884583 : f32
    %29 = vector.broadcast %cst_16 : f32 to vector<16x64xf32>
    %30 = arith.mulf %29, %28 : vector<16x64xf32>
    %31 = math.tanh %30 : vector<16x64xf32>
    %cst_17 = arith.constant 1.000000e+00 : f32
    %32 = vector.broadcast %cst_17 : f32 to vector<16x64xf32>
    %33 = arith.addf %32, %31 : vector<16x64xf32>
    %cst_18 = arith.constant 5.000000e-01 : f32
    %34 = vector.broadcast %cst_18 : f32 to vector<16x64xf32>
    %35 = arith.mulf %34, %33 : vector<16x64xf32>
    %36 = arith.mulf %23, %35 : vector<16x64xf32>
    %37 = vector.extract_strided_slice %22 {offsets = [0, 64], sizes = [16, 64], strides = [1, 1]} : vector<16x128xf32> to vector<16x64xf32>
    %38 = arith.mulf %36, %37 : vector<16x64xf32>
    %39 = arith.truncf %38 : vector<16x64xf32> to vector<16x64xbf16>
    %cst_19 = arith.constant dense<0.000000e+00> : vector<16x32xf32>
    %40 = tpu.matmul %39, %8, %cst_19 {dimension_numbers = #tpu.dot_dimension_numbers<[1], [0], [0], [1], [0, 0, 1, 1], [], []>} : vector<16x64xbf16>, vector<64x32xbf16>, vector<16x32xf32> -> vector<16x32xf32>
    %41 = arith.addf %5, %40 : vector<16x32xf32>
    %c0_20 = arith.constant 0 : index
    %c0_21 = arith.constant 0 : index
    %42 = vector.load %arg6[%c0_20, %c0_21] : memref<1x32xf32, #tpu.memory_space<vmem>>, vector<1x32xf32>
    %43 = arith.mulf %41, %41 : vector<16x32xf32>
    %cst_22 = arith.constant dense<0.000000e+00> : vector<16xf32>
    %44 = vector.multi_reduction <add>, %43, %cst_22 [1] : vector<16x32xf32> to vector<16xf32>
    %45 = vector.shape_cast %44 : vector<16xf32> to vector<16x1xf32>
    %cst_23 = arith.constant 3.200000e+01 : f32
    %46 = vector.broadcast %cst_23 : f32 to vector<16x1xf32>
    %47 = arith.divf %45, %46 : vector<16x1xf32>
    %cst_24 = arith.constant 9.99999997E-7 : f32
    %48 = vector.broadcast %cst_24 : f32 to vector<16x1xf32>
    %49 = arith.addf %47, %48 : vector<16x1xf32>
    %50 = math.rsqrt %49 : vector<16x1xf32>
    %51 = vector.broadcast %50 : vector<16x1xf32> to vector<16x32xf32>
    %52 = arith.mulf %41, %51 : vector<16x32xf32>
    %53 = vector.broadcast %42 : vector<1x32xf32> to vector<16x32xf32>
    %54 = arith.mulf %52, %53 : vector<16x32xf32>
    %55 = arith.truncf %54 : vector<16x32xf32> to vector<16x32xbf16>
    %c0_25 = arith.constant 0 : index
    %c0_26 = arith.constant 0 : index
    %56 = vector.load %arg7[%c0_25, %c0_26] : memref<32x64xbf16, #tpu.memory_space<vmem>>, vector<32x64xbf16>
    %cst_27 = arith.constant dense<0.000000e+00> : vector<16x64xf32>
    %57 = tpu.matmul %55, %56, %cst_27 {dimension_numbers = #tpu.dot_dimension_numbers<[1], [0], [0], [1], [0, 0, 1, 1], [], []>} : vector<16x32xbf16>, vector<32x64xbf16>, vector<16x64xf32> -> vector<16x64xf32>
    %c0_28 = arith.constant 0 : index
    %c0_29 = arith.constant 0 : index
    %58 = vector.load %arg8[%c0_28, %c0_29] : memref<16x64xf32, #tpu.memory_space<vmem>>, vector<16x64xf32>
    tpu.vector_store %arg8[%c0_28, %c0_29], %57 {strides = array<i32>} : memref<16x64xf32, #tpu.memory_space<vmem>>, vector<16x64xf32>,
    return
  }
}

module attributes {stable_mosaic.version = 11 : i64} {
  func.func @_dec_tail_ce_kernel(%arg0: memref<16x32xf32, #tpu.memory_space<vmem>>, %arg1: memref<32x32xbf16, #tpu.memory_space<vmem>>, %arg2: memref<16x32xf32, #tpu.memory_space<vmem>>, %arg3: memref<1x32xf32, #tpu.memory_space<vmem>>, %arg4: memref<32x128xbf16, #tpu.memory_space<vmem>>, %arg5: memref<64x32xbf16, #tpu.memory_space<vmem>>, %arg6: memref<1x32xf32, #tpu.memory_space<vmem>>, %arg7: memref<32x64xbf16, #tpu.memory_space<vmem>>, %arg8: memref<16x1xi32, #tpu.memory_space<vmem>>, %arg9: memref<1x1xf32, #tpu.memory_space<smem>>, %arg10: memref<1x1xf32, #tpu.memory_space<smem>>) attributes {dimension_semantics = [], scalar_prefetch = 0 : i64, scratch_operands = 0 : i64, tpu.core_type = #tpu.core_type<tc>} {
    %c0 = arith.constant 0 : index
    %c0_0 = arith.constant 0 : index
    %0 = vector.load %arg0[%c0, %c0_0] : memref<16x32xf32, #tpu.memory_space<vmem>>, vector<16x32xf32>
    %c0_1 = arith.constant 0 : index
    %c0_2 = arith.constant 0 : index
    %1 = vector.load %arg1[%c0_1, %c0_2] : memref<32x32xbf16, #tpu.memory_space<vmem>>, vector<32x32xbf16>
    %c0_3 = arith.constant 0 : index
    %c0_4 = arith.constant 0 : index
    %2 = vector.load %arg2[%c0_3, %c0_4] : memref<16x32xf32, #tpu.memory_space<vmem>>, vector<16x32xf32>
    %3 = arith.truncf %0 : vector<16x32xf32> to vector<16x32xbf16>
    %cst = arith.constant dense<0.000000e+00> : vector<16x32xf32>
    %4 = tpu.matmul %3, %1, %cst {dimension_numbers = #tpu.dot_dimension_numbers<[1], [0], [0], [1], [0, 0, 1, 1], [], []>} : vector<16x32xbf16>, vector<32x32xbf16>, vector<16x32xf32> -> vector<16x32xf32>
    %5 = arith.addf %2, %4 : vector<16x32xf32>
    %c0_5 = arith.constant 0 : index
    %c0_6 = arith.constant 0 : index
    %6 = vector.load %arg3[%c0_5, %c0_6] : memref<1x32xf32, #tpu.memory_space<vmem>>, vector<1x32xf32>
    %c0_7 = arith.constant 0 : index
    %c0_8 = arith.constant 0 : index
    %7 = vector.load %arg4[%c0_7, %c0_8] : memref<32x128xbf16, #tpu.memory_space<vmem>>, vector<32x128xbf16>
    %c0_9 = arith.constant 0 : index
    %c0_10 = arith.constant 0 : index
    %8 = vector.load %arg5[%c0_9, %c0_10] : memref<64x32xbf16, #tpu.memory_space<vmem>>, vector<64x32xbf16>
    %9 = arith.mulf %5, %5 : vector<16x32xf32>
    %cst_11 = arith.constant dense<0.000000e+00> : vector<16xf32>
    %10 = vector.multi_reduction <add>, %9, %cst_11 [1] : vector<16x32xf32> to vector<16xf32>
    %11 = vector.shape_cast %10 : vector<16xf32> to vector<16x1xf32>
    %cst_12 = arith.constant 3.200000e+01 : f32
    %12 = vector.broadcast %cst_12 : f32 to vector<16x1xf32>
    %13 = arith.divf %11, %12 : vector<16x1xf32>
    %cst_13 = arith.constant 9.99999997E-7 : f32
    %14 = vector.broadcast %cst_13 : f32 to vector<16x1xf32>
    %15 = arith.addf %13, %14 : vector<16x1xf32>
    %16 = math.rsqrt %15 : vector<16x1xf32>
    %17 = vector.broadcast %16 : vector<16x1xf32> to vector<16x32xf32>
    %18 = arith.mulf %5, %17 : vector<16x32xf32>
    %19 = vector.broadcast %6 : vector<1x32xf32> to vector<16x32xf32>
    %20 = arith.mulf %18, %19 : vector<16x32xf32>
    %21 = arith.truncf %20 : vector<16x32xf32> to vector<16x32xbf16>
    %cst_14 = arith.constant dense<0.000000e+00> : vector<16x128xf32>
    %22 = tpu.matmul %21, %7, %cst_14 {dimension_numbers = #tpu.dot_dimension_numbers<[1], [0], [0], [1], [0, 0, 1, 1], [], []>} : vector<16x32xbf16>, vector<32x128xbf16>, vector<16x128xf32> -> vector<16x128xf32>
    %23 = vector.extract_strided_slice %22 {offsets = [0, 0], sizes = [16, 64], strides = [1, 1]} : vector<16x128xf32> to vector<16x64xf32>
    %24 = arith.mulf %23, %23 : vector<16x64xf32>
    %25 = arith.mulf %23, %24 : vector<16x64xf32>
    %cst_15 = arith.constant 4.471500e-02 : f32
    %26 = vector.broadcast %cst_15 : f32 to vector<16x64xf32>
    %27 = arith.mulf %26, %25 : vector<16x64xf32>
    %28 = arith.addf %23, %27 : vector<16x64xf32>
    %cst_16 = arith.constant 0.797884583 : f32
    %29 = vector.broadcast %cst_16 : f32 to vector<16x64xf32>
    %30 = arith.mulf %29, %28 : vector<16x64xf32>
    %31 = math.tanh %30 : vector<16x64xf32>
    %cst_17 = arith.constant 1.000000e+00 : f32
    %32 = vector.broadcast %cst_17 : f32 to vector<16x64xf32>
    %33 = arith.addf %32, %31 : vector<16x64xf32>
    %cst_18 = arith.constant 5.000000e-01 : f32
    %34 = vector.broadcast %cst_18 : f32 to vector<16x64xf32>
    %35 = arith.mulf %34, %33 : vector<16x64xf32>
    %36 = arith.mulf %23, %35 : vector<16x64xf32>
    %37 = vector.extract_strided_slice %22 {offsets = [0, 64], sizes = [16, 64], strides = [1, 1]} : vector<16x128xf32> to vector<16x64xf32>
    %38 = arith.mulf %36, %37 : vector<16x64xf32>
    %39 = arith.truncf %38 : vector<16x64xf32> to vector<16x64xbf16>
    %cst_19 = arith.constant dense<0.000000e+00> : vector<16x32xf32>
    %40 = tpu.matmul %39, %8, %cst_19 {dimension_numbers = #tpu.dot_dimension_numbers<[1], [0], [0], [1], [0, 0, 1, 1], [], []>} : vector<16x64xbf16>, vector<64x32xbf16>, vector<16x32xf32> -> vector<16x32xf32>
    %41 = arith.addf %5, %40 : vector<16x32xf32>
    %c0_20 = arith.constant 0 : index
    %c0_21 = arith.constant 0 : index
    %42 = vector.load %arg6[%c0_20, %c0_21] : memref<1x32xf32, #tpu.memory_space<vmem>>, vector<1x32xf32>
    %43 = arith.mulf %41, %41 : vector<16x32xf32>
    %cst_22 = arith.constant dense<0.000000e+00> : vector<16xf32>
    %44 = vector.multi_reduction <add>, %43, %cst_22 [1] : vector<16x32xf32> to vector<16xf32>
    %45 = vector.shape_cast %44 : vector<16xf32> to vector<16x1xf32>
    %cst_23 = arith.constant 3.200000e+01 : f32
    %46 = vector.broadcast %cst_23 : f32 to vector<16x1xf32>
    %47 = arith.divf %45, %46 : vector<16x1xf32>
    %cst_24 = arith.constant 9.99999997E-7 : f32
    %48 = vector.broadcast %cst_24 : f32 to vector<16x1xf32>
    %49 = arith.addf %47, %48 : vector<16x1xf32>
    %50 = math.rsqrt %49 : vector<16x1xf32>
    %51 = vector.broadcast %50 : vector<16x1xf32> to vector<16x32xf32>
    %52 = arith.mulf %41, %51 : vector<16x32xf32>
    %53 = vector.broadcast %42 : vector<1x32xf32> to vector<16x32xf32>
    %54 = arith.mulf %52, %53 : vector<16x32xf32>
    %55 = arith.truncf %54 : vector<16x32xf32> to vector<16x32xbf16>
    %c0_25 = arith.constant 0 : index
    %c0_26 = arith.constant 0 : index
    %56 = vector.load %arg7[%c0_25, %c0_26] : memref<32x64xbf16, #tpu.memory_space<vmem>>, vector<32x64xbf16>
    %cst_27 = arith.constant dense<0.000000e+00> : vector<16x64xf32>
    %57 = tpu.matmul %55, %56, %cst_27 {dimension_numbers = #tpu.dot_dimension_numbers<[1], [0], [0], [1], [0, 0, 1, 1], [], []>} : vector<16x32xbf16>, vector<32x64xbf16>, vector<16x64xf32> -> vector<16x64xf32>
    %c0_28 = arith.constant 0 : index
    %c0_29 = arith.constant 0 : index
    %58 = vector.load %arg8[%c0_28, %c0_29] : memref<16x1xi32, #tpu.memory_space<vmem>>, vector<16x1xi32>
    %cst_30 = arith.constant dense<0xFF800000> : vector<16xf32>
    %59 = vector.multi_reduction <maximumf>, %57, %cst_30 [1] : vector<16x64xf32> to vector<16xf32>
    %60 = vector.shape_cast %59 : vector<16xf32> to vector<16x1xf32>
    %61 = vector.broadcast %60 : vector<16x1xf32> to vector<16x64xf32>
    %62 = arith.subf %57, %61 : vector<16x64xf32>
    %63 = math.exp %62 : vector<16x64xf32>
    %cst_31 = arith.constant dense<0.000000e+00> : vector<16xf32>
    %64 = vector.multi_reduction <add>, %63, %cst_31 [1] : vector<16x64xf32> to vector<16xf32>
    %65 = vector.shape_cast %64 : vector<16xf32> to vector<16x1xf32>
    %66 = math.log %65 : vector<16x1xf32>
    %67 = arith.addf %66, %60 : vector<16x1xf32>
    %68 = tpu.iota {dimensions = array<i32: 1>} : vector<16x64xi32>
    %69 = vector.broadcast %58 : vector<16x1xi32> to vector<16x64xi32>
    %70 = arith.cmpi eq, %68, %69 : vector<16x64xi32>
    %71 = arith.extui %70 : vector<16x64xi1> to vector<16x64xi32>
    %72 = arith.sitofp %71 : vector<16x64xi32> to vector<16x64xf32>
    %73 = arith.mulf %57, %72 : vector<16x64xf32>
    %cst_32 = arith.constant dense<0.000000e+00> : vector<16xf32>
    %74 = vector.multi_reduction <add>, %73, %cst_32 [1] : vector<16x64xf32> to vector<16xf32>
    %75 = vector.shape_cast %74 : vector<16xf32> to vector<16x1xf32>
    %c-100_i32 = arith.constant -100 : i32
    %76 = vector.broadcast %c-100_i32 : i32 to vector<16x1xi32>
    %77 = arith.cmpi ne, %58, %76 : vector<16x1xi32>
    %78 = arith.extui %77 : vector<16x1xi1> to vector<16x1xi32>
    %79 = arith.sitofp %78 : vector<16x1xi32> to vector<16x1xf32>
    %80 = arith.subf %67, %75 : vector<16x1xf32>
    %81 = arith.mulf %80, %79 : vector<16x1xf32>
    %82 = vector.shape_cast %81 : vector<16x1xf32> to vector<1x16x1xf32>
    %cst_33 = arith.constant dense<0.000000e+00> : vector<1xf32>
    %83 = vector.multi_reduction <add>, %82, %cst_33 [1, 2] : vector<1x16x1xf32> to vector<1xf32>
    %84 = vector.shape_cast %83 : vector<1xf32> to vector<1x1x1xf32>
    %85 = vector.extract %84[0, 0, 0] : f32 from vector<1x1x1xf32>
    %c0_34 = arith.constant 0 : index
    %c0_35 = arith.constant 0 : index
    %86 = memref.load %arg9[%c0_34, %c0_35] : memref<1x1xf32, #tpu.memory_space<smem>>
    memref.store %85, %arg9[%c0_34, %c0_35] : memref<1x1xf32, #tpu.memory_space<smem>>
    %87 = vector.shape_cast %79 : vector<16x1xf32> to vector<1x16x1xf32>
    %cst_36 = arith.constant dense<0.000000e+00> : vector<1xf32>
    %88 = vector.multi_reduction <add>, %87, %cst_36 [1, 2] : vector<1x16x1xf32> to vector<1xf32>
    %89 = vector.shape_cast %88 : vector<1xf32> to vector<1x1x1xf32>
    %90 = vector.extract %89[0, 0, 0] : f32 from vector<1x1x1xf32>
    %c0_37 = arith.constant 0 : index
    %c0_38 = arith.constant 0 : index
    %91 = memref.load %arg10[%c0_37, %c0_38] : memref<1x1xf32, #tpu.memory_space<smem>>
    memref.store %90, %arg10[%c0_37, %c0_38] : memref<1x1xf32, #tpu.memory_space<smem>>
    return
  }
}

</mosaic_0001>

<llo_original>
// kernel: t5_loss.11
$region0: #{t5_loss.11}
  #allocation0 [shape = 'u32[]', space=smem, size = 0x4, offset = 0x4, fixed_abs, tag = 'smem constant byte address 0x4 - core index']
  #allocation1 [shape = 'u32[144,128]{1,0:T(1,128)}', space=vmem, size = 0x12000, scoped, tag = 'internal scratch']
  %s0 = inlined_call_operand.vmem [shape: f32[16,32], index: 0, kind: input, shape index: {}]
  %s1 = inlined_call_operand.vmem [shape: f32[1,32], index: 1, kind: input, shape index: {}]
  %s2 = inlined_call_operand.vmem [shape: bf16[32,96], index: 2, kind: input, shape index: {}]
  %s3 = inlined_call_operand.vmem [shape: f32[16,96], index: 3, kind: output, shape index: {}]
  %s4 = sld [smem:[#allocation0]]
  $region22: #{t5_loss.11} parent=0
    _
  %s6 = ssub.s32 1, %s4
  %s7 = scalar_select 0, %s6, %s4
  // Predicated region
  $region2: #{t5_loss.11} parent=0 // pred_check
    _
  $region3: #{t5_loss.11} parent=0 // pred_check_branch
    %9 = sbr.rel (0) target = $region5
  $region4: #{t5_loss.11} parent=0 // pred_region
    _
  $region5: #{t5_loss.11} parent=0 // pred_fallthru
    _
  // Predicated region
  $region6: #{t5_loss.11} parent=0 // pred_check
    _
  $region7: #{t5_loss.11} parent=0 // pred_check_branch
    %11 = sbr.rel (0) target = $region9
  $region8: #{t5_loss.11} parent=0 // pred_region
    _
  $region9: #{t5_loss.11} parent=0 // pred_fallthru
    _
  // Predicated region
  $region10: #{t5_loss.11} parent=0 // pred_check
    _
  $region11: #{t5_loss.11} parent=0 // pred_check_branch
    %13 = sbr.rel (0) target = $region13
  $region12: #{t5_loss.11} parent=0 // pred_region
    _
  $region13: #{t5_loss.11} parent=0 // pred_fallthru
    _
  %v15 = vld [vmem:[%s0] sm:$0xff]
  %v16 = vld [vmem:[%s0 + $0x8] sm:$0xff]
  %v17 = vld [vmem:[%s1] sm:$0x1]
  %v18 = vmul.f32 %v15, %v15
  %v19 = vmul.f32 %v16, %v16
  %vm20 = vcmask 261120
  %v21 = vsel %vm20, %v18, 0.0
  %22 = vadd.xlane.f32.xlu0 %v21
  %v23 = vpop.xlane.xlu0 %22
  %v24 = vsel %vm20, %v19, 0.0
  %25 = vadd.xlane.f32.xlu0 %v24
  %v26 = vpop.xlane.xlu0 %25
  %v27 = vrcp.pop 32.0
  %v28 = vmul.f32 %v23, %v27
  %v29 = vmul.f32 %v26, %v27
  %v30 = vadd.f32 %v28, 1e-06
  %v31 = vadd.f32 %v29, 1e-06
  %v32 = vrsqrt.pop %v30
  %v33 = vrsqrt.pop %v31
  %v34 = vmul.f32 %v15, %v32
  %v35 = vmul.f32 %v16, %v33
  %v37 = vlaneseq
  %v38 = vshrl.u32 %v37, 7
  %v39 = vsub.s32 0, %v38
  %v40 = vrot.slane %v17, %v39
  %v42 = vmul.f32 %v34, %v40
  %v43 = vmul.f32 %v35, %v40
  %v44 = vpack.c.bf16 %v43, %v42
  %v45 = vld [vmem:[%s2] sm:$0xf]
  %v46 = vld [vmem:[%s2 + $0x4] sm:$0xf]
  %v47 = vld [vmem:[%s2 + $0x8] sm:$0xf]
  %v48 = vld [vmem:[%s2 + $0xc] sm:$0xf]
  %v53 = vunpack.c.l.b16 %v45
  %v54 = vunpack.c.l.b16 %v46
  %v55 = vunpack.c.l.b16 %v47
  %v56 = vunpack.c.l.b16 %v48
  %v57 = vpack.c.b16 %v54, %v53
  %v58 = vpack.c.b16 %v56, %v55
  %v62 = vsel %vm20, %v44, 0
  %64 = vmatprep.subr.bf16.mxu0 0
  %65 = vmatpush1.bf16.msra.mxu0 0
  %66 = vmatprep.subr.bf16.mxu0 0
  %67 = vmatpush1.bf16.msra.mxu0 0
  %68 = vmatprep.subr.bf16.mxu0 0
  %69 = vmatpush1.bf16.msra.mxu0 0
  %70 = vmatprep.subr.bf16.mxu0 0
  %71 = vmatpush1.bf16.msra.mxu0 0
  %72 = vmatprep.subr.bf16.mxu0 0
  %73 = vmatpush1.bf16.msra.mxu0 0
  %74 = vmatprep.subr.bf16.mxu0 0
  %75 = vmatpush1.bf16.msra.mxu0 0
  %76 = vmatprep.subr.bf16.mxu0 0
  %77 = vmatpush1.bf16.msra.mxu0 %v58
  %78 = vmatprep.subr.bf16.mxu0 0
  %79 = vmatpush1.bf16.msra.mxu0 %v57
  %80 = vmatprep.subr.bf16.mxu0 0
  %81 = vmatpush2.bf16.msra.mxu0 0
  %82 = vmatprep.subr.bf16.mxu0 0
  %83 = vmatpush2.bf16.msra.mxu0 0
  %84 = vmatprep.subr.bf16.mxu0 0
  %85 = vmatpush2.bf16.msra.mxu0 0
  %86 = vmatprep.subr.bf16.mxu0 0
  %87 = vmatpush2.bf16.msra.mxu0 0
  %88 = vmatprep.subr.bf16.mxu0 0
  %89 = vmatpush2.bf16.msra.mxu0 0
  %90 = vmatprep.subr.bf16.mxu0 0
  %91 = vmatpush2.bf16.msra.mxu0 0
  %92 = vmatprep.subr.bf16.mxu0 0
  %93 = vmatpush2.bf16.msra.mxu0 0
  %94 = vmatprep.subr.bf16.mxu0 0
  %95 = vmatpush2.bf16.msra.mxu0 0
  %96 = vmatprep.mubr.bf16.mxu0 0
  %97 = vmatmul.mubr.bf16.gmra.mxu0 %v62
  %v98 = vpop.f32.mrf.mxu0
  %v99 = vadd.f32 0.0, %v98
  %v100 = vpop.f32.mrf.mxu0
  %v101 = vpop.f32.mrf.mxu0
  %v102 = vadd.f32 0.0, %v101
  %v103 = vpop.f32.mrf.mxu0
  %104 = vdwg.mxu0
  %vm105 = vcmask 785408
  %106 = vst.msk [vmem:[%s3] sm:$0xff] %vm105, %v99
  %107 = vst.msk [vmem:[%s3 + $0x8] sm:$0xff] %vm105, %v102
  // Predicated region
  $region14: #{t5_loss.11} parent=0 // pred_check
    _
  $region15: #{t5_loss.11} parent=0 // pred_check_branch
    %109 = sbr.rel (0) target = $region17
  $region16: #{t5_loss.11} parent=0 // pred_region
    _
  $region17: #{t5_loss.11} parent=0 // pred_fallthru
    _
  // Predicated region
  $region18: #{t5_loss.11} parent=0 // pred_check
    _
  $region19: #{t5_loss.11} parent=0 // pred_check_branch
    %111 = sbr.rel (0) target = $region21
  $region20: #{t5_loss.11} parent=0 // pred_region
    _
  $region21: #{t5_loss.11} parent=0 // pred_fallthru
    _

// kernel: t5_loss.13
$region0: #{t5_loss.13}
  #allocation0 [shape = 'u32[]', space=smem, size = 0x4, offset = 0x4, fixed_abs, tag = 'smem constant byte address 0x4 - core index']
  #allocation1 [shape = 'u32[144,128]{1,0:T(1,128)}', space=vmem, size = 0x12000, scoped, tag = 'internal scratch']
  %s0 = inlined_call_operand.vmem [shape: f32[16,32], index: 0, kind: input, shape index: {}]
  %s1 = inlined_call_operand.vmem [shape: bf16[32,32], index: 1, kind: input, shape index: {}]
  %s2 = inlined_call_operand.vmem [shape: f32[16,32], index: 2, kind: input, shape index: {}]
  %s3 = inlined_call_operand.vmem [shape: f32[1,32], index: 3, kind: input, shape index: {}]
  %s4 = inlined_call_operand.vmem [shape: bf16[32,32], index: 4, kind: input, shape index: {}]
  %s5 = inlined_call_operand.vmem [shape: f32[16,32], index: 5, kind: output, shape index: {0}]
  %s6 = inlined_call_operand.vmem [shape: f32[16,32], index: 6, kind: output, shape index: {1}]
  %7 = xla_tuple %s5, %s6
  %s8 = sld [smem:[#allocation0]]
  $region38: #{t5_loss.13} parent=0
    _
  %s10 = ssub.s32 1, %s8
  %s11 = scalar_select 0, %s10, %s8
  // Predicated region
  $region2: #{t5_loss.13} parent=0 // pred_check
    _
  $region3: #{t5_loss.13} parent=0 // pred_check_branch
    %13 = sbr.rel (0) target = $region5
  $region4: #{t5_loss.13} parent=0 // pred_region
    _
  $region5: #{t5_loss.13} parent=0 // pred_fallthru
    _
  // Predicated region
  $region6: #{t5_loss.13} parent=0 // pred_check
    _
  $region7: #{t5_loss.13} parent=0 // pred_check_branch
    %15 = sbr.rel (0) target = $region9
  $region8: #{t5_loss.13} parent=0 // pred_region
    _
  $region9: #{t5_loss.13} parent=0 // pred_fallthru
    _
  // Predicated region
  $region10: #{t5_loss.13} parent=0 // pred_check
    _
  $region11: #{t5_loss.13} parent=0 // pred_check_branch
    %17 = sbr.rel (0) target = $region13
  $region12: #{t5_loss.13} parent=0 // pred_region
    _
  $region13: #{t5_loss.13} parent=0 // pred_fallthru
    _
  // Predicated region
  $region14: #{t5_loss.13} parent=0 // pred_check
    _
  $region15: #{t5_loss.13} parent=0 // pred_check_branch
    %19 = sbr.rel (0) target = $region17
  $region16: #{t5_loss.13} parent=0 // pred_region
    _
  $region17: #{t5_loss.13} parent=0 // pred_fallthru
    _
  // Predicated region
  $region18: #{t5_loss.13} parent=0 // pred_check
    _
  $region19: #{t5_loss.13} parent=0 // pred_check_branch
    %21 = sbr.rel (0) target = $region21
  $region20: #{t5_loss.13} parent=0 // pred_region
    _
  $region21: #{t5_loss.13} parent=0 // pred_fallthru
    _
  %v23 = vld [vmem:[%s0] sm:$0xff]
  %v24 = vld [vmem:[%s0 + $0x8] sm:$0xff]
  %v25 = vld [vmem:[%s1] sm:$0xf]
  %v26 = vld [vmem:[%s1 + $0x4] sm:$0xf]
  %v27 = vld [vmem:[%s1 + $0x8] sm:$0xf]
  %v28 = vld [vmem:[%s1 + $0xc] sm:$0xf]
  %v29 = vld [vmem:[%s2] sm:$0xff]
  %v30 = vld [vmem:[%s2 + $0x8] sm:$0xff]
  %v31 = vpack.c.bf16 %v24, %v23
  %v36 = vunpack.c.l.b16 %v25
  %v37 = vunpack.c.l.b16 %v26
  %v38 = vunpack.c.l.b16 %v27
  %v39 = vunpack.c.l.b16 %v28
  %v40 = vpack.c.b16 %v37, %v36
  %v41 = vpack.c.b16 %v39, %v38
  %vm44 = vcmask 261120
  %v46 = vsel %vm44, %v31, 0
  %48 = vmatprep.subr.bf16.mxu0 0
  %49 = vmatpush1.bf16.msra.mxu0 0
  %50 = vmatprep.subr.bf16.mxu0 0
  %51 = vmatpush1.bf16.msra.mxu0 0
  %52 = vmatprep.subr.bf16.mxu0 0
  %53 = vmatpush1.bf16.msra.mxu0 0
  %54 = vmatprep.subr.bf16.mxu0 0
  %55 = vmatpush1.bf16.msra.mxu0 0
  %56 = vmatprep.subr.bf16.mxu0 0
  %57 = vmatpush1.bf16.msra.mxu0 0
  %58 = vmatprep.subr.bf16.mxu0 0
  %59 = vmatpush1.bf16.msra.mxu0 0
  %60 = vmatprep.subr.bf16.mxu0 0
  %61 = vmatpush1.bf16.msra.mxu0 %v41
  %62 = vmatprep.subr.bf16.mxu0 0
  %63 = vmatpush1.bf16.msra.mxu0 %v40
  %64 = vmatprep.subr.bf16.mxu0 0
  %65 = vmatpush2.bf16.msra.mxu0 0
  %66 = vmatprep.subr.bf16.mxu0 0
  %67 = vmatpush2.bf16.msra.mxu0 0
  %68 = vmatprep.subr.bf16.mxu0 0
  %69 = vmatpush2.bf16.msra.mxu0 0
  %70 = vmatprep.subr.bf16.mxu0 0
  %71 = vmatpush2.bf16.msra.mxu0 0
  %72 = vmatprep.subr.bf16.mxu0 0
  %73 = vmatpush2.bf16.msra.mxu0 0
  %74 = vmatprep.subr.bf16.mxu0 0
  %75 = vmatpush2.bf16.msra.mxu0 0
  %76 = vmatprep.subr.bf16.mxu0 0
  %77 = vmatpush2.bf16.msra.mxu0 0
  %78 = vmatprep.subr.bf16.mxu0 0
  %79 = vmatpush2.bf16.msra.mxu0 0
  %80 = vmatprep.mubr.bf16.mxu0 0
  %81 = vmatmul.mubr.bf16.gmra.mxu0 %v46
  %v82 = vpop.f32.mrf.mxu0
  %v83 = vadd.f32 0.0, %v82
  %v84 = vpop.f32.mrf.mxu0
  %v85 = vpop.f32.mrf.mxu0
  %v86 = vadd.f32 0.0, %v85
  %v87 = vpop.f32.mrf.mxu0
  %88 = vdwg.mxu0
  %v89 = vadd.f32 %v29, %v83
  %v90 = vadd.f32 %v30, %v86
  %91 = vst.msk [vmem:[%s5] sm:$0xff] %vm44, %v89
  %92 = vst.msk [vmem:[%s5 + $0x8] sm:$0xff] %vm44, %v90
  %v93 = vld [vmem:[%s3] sm:$0x1]
  %v94 = vmul.f32 %v89, %v89
  %v95 = vmul.f32 %v90, %v90
  %v96 = vsel %vm44, %v94, 0.0
  %97 = vadd.xlane.f32.xlu0 %v96
  %v98 = vpop.xlane.xlu0 %97
  %v99 = vsel %vm44, %v95, 0.0
  %100 = vadd.xlane.f32.xlu0 %v99
  %v101 = vpop.xlane.xlu0 %100
  %v102 = vrcp.pop 32.0
  %v103 = vmul.f32 %v98, %v102
  %v104 = vmul.f32 %v101, %v102
  %v105 = vadd.f32 %v103, 1e-06
  %v106 = vadd.f32 %v104, 1e-06
  %v107 = vrsqrt.pop %v105
  %v108 = vrsqrt.pop %v106
  %v109 = vmul.f32 %v89, %v107
  %v110 = vmul.f32 %v90, %v108
  %v112 = vlaneseq
  %v113 = vshrl.u32 %v112, 7
  %v114 = vsub.s32 0, %v113
  %v115 = vrot.slane %v93, %v114
  %v117 = vmul.f32 %v109, %v115
  %v118 = vmul.f32 %v110, %v115
  %v119 = vpack.c.bf16 %v118, %v117
  %v120 = vld [vmem:[%s4] sm:$0xf]
  %v121 = vld [vmem:[%s4 + $0x4] sm:$0xf]
  %v122 = vld [vmem:[%s4 + $0x8] sm:$0xf]
  %v123 = vld [vmem:[%s4 + $0xc] sm:$0xf]
  %v128 = vunpack.c.l.b16 %v120
  %v129 = vunpack.c.l.b16 %v121
  %v130 = vunpack.c.l.b16 %v122
  %v131 = vunpack.c.l.b16 %v123
  %v132 = vpack.c.b16 %v129, %v128
  %v133 = vpack.c.b16 %v131, %v130
  %v137 = vsel %vm44, %v119, 0
  %139 = vmatprep.subr.bf16.mxu0 0
  %140 = vmatpush1.bf16.msra.mxu0 0
  %141 = vmatprep.subr.bf16.mxu0 0
  %142 = vmatpush1.bf16.msra.mxu0 0
  %143 = vmatprep.subr.bf16.mxu0 0
  %144 = vmatpush1.bf16.msra.mxu0 0
  %145 = vmatprep.subr.bf16.mxu0 0
  %146 = vmatpush1.bf16.msra.mxu0 0
  %147 = vmatprep.subr.bf16.mxu0 0
  %148 = vmatpush1.bf16.msra.mxu0 0
  %149 = vmatprep.subr.bf16.mxu0 0
  %150 = vmatpush1.bf16.msra.mxu0 0
  %151 = vmatprep.subr.bf16.mxu0 0
  %152 = vmatpush1.bf16.msra.mxu0 %v133
  %153 = vmatprep.subr.bf16.mxu0 0
  %154 = vmatpush1.bf16.msra.mxu0 %v132
  %155 = vmatprep.subr.bf16.mxu0 0
  %156 = vmatpush2.bf16.msra.mxu0 0
  %157 = vmatprep.subr.bf16.mxu0 0
  %158 = vmatpush2.bf16.msra.mxu0 0
  %159 = vmatprep.subr.bf16.mxu0 0
  %160 = vmatpush2.bf16.msra.mxu0 0
  %161 = vmatprep.subr.bf16.mxu0 0
  %162 = vmatpush2.bf16.msra.mxu0 0
  %163 = vmatprep.subr.bf16.mxu0 0
  %164 = vmatpush2.bf16.msra.mxu0 0
  %165 = vmatprep.subr.bf16.mxu0 0
  %166 = vmatpush2.bf16.msra.mxu0 0
  %167 = vmatprep.subr.bf16.mxu0 0
  %168 = vmatpush2.bf16.msra.mxu0 0
  %169 = vmatprep.subr.bf16.mxu0 0
  %170 = vmatpush2.bf16.msra.mxu0 0
  %171 = vmatprep.mubr.bf16.mxu0 0
  %172 = vmatmul.mubr.bf16.gmra.mxu0 %v137
  %v173 = vpop.f32.mrf.mxu0
  %v174 = vadd.f32 0.0, %v173
  %v175 = vpop.f32.mrf.mxu0
  %v176 = vpop.f32.mrf.mxu0
  %v177 = vadd.f32 0.0, %v176
  %v178 = vpop.f32.mrf.mxu0
  %179 = vdwg.mxu0
  %180 = vst.msk [vmem:[%s6] sm:$0xff] %vm44, %v174
  %181 = vst.msk [vmem:[%s6 + $0x8] sm:$0xff] %vm44, %v177
  // Predicated region
  $region22: #{t5_loss.13} parent=0 // pred_check
    _
  $region23: #{t5_loss.13} parent=0 // pred_check_branch
    %183 = sbr.rel (0) target = $region25
  $region24: #{t5_loss.13} parent=0 // pred_region
    _
  $region25: #{t5_loss.13} parent=0 // pred_fallthru
    _
  // Predicated region
  $region26: #{t5_loss.13} parent=0 // pred_check
    _
  $region27: #{t5_loss.13} parent=0 // pred_check_branch
    %185 = sbr.rel (0) target = $region29
  $region28: #{t5_loss.13} parent=0 // pred_region
    _
  $region29: #{t5_loss.13} parent=0 // pred_fallthru
    _
  // Predicated region
  $region30: #{t5_loss.13} parent=0 // pred_check
    _
  $region31: #{t5_loss.13} parent=0 // pred_check_branch
    %187 = sbr.rel (0) target = $region33
  $region32: #{t5_loss.13} parent=0 // pred_region
    _
  $region33: #{t5_loss.13} parent=0 // pred_fallthru
    _
  // Predicated region
  $region34: #{t5_loss.13} parent=0 // pred_check
    _
  $region35: #{t5_loss.13} parent=0 // pred_check_branch
    %189 = sbr.rel (0) target = $region37
  $region36: #{t5_loss.13} parent=0 // pred_region
    _
  $region37: #{t5_loss.13} parent=0 // pred_fallthru
    _

// kernel: t5_loss.12
$region0: #{t5_loss.12}
  #allocation0 [shape = 'u32[]', space=smem, size = 0x4, offset = 0x4, fixed_abs, tag = 'smem constant byte address 0x4 - core index']
  #allocation1 [shape = 'u32[144,128]{1,0:T(1,128)}', space=vmem, size = 0x12000, scoped, tag = 'internal scratch']
  %s0 = inlined_call_operand.vmem [shape: f32[8,8,8], index: 0, kind: input, shape index: {}]
  %s1 = inlined_call_operand.vmem [shape: f32[8,8,8], index: 1, kind: input, shape index: {}]
  %s2 = inlined_call_operand.vmem [shape: f32[8,8,8], index: 2, kind: input, shape index: {}]
  %s3 = inlined_call_operand.vmem [shape: f32[1,4,8,8], index: 3, kind: input, shape index: {}]
  %s4 = inlined_call_operand.vmem [shape: f32[2,1,8,8], index: 4, kind: input, shape index: {}]
  %s5 = inlined_call_operand.vmem [shape: f32[8,8,8], index: 5, kind: output, shape index: {}]
  %s6 = sld [smem:[#allocation0]]
  $region30: #{t5_loss.12} parent=0
    _
  %s8 = ssub.s32 1, %s6
  %s9 = scalar_select 0, %s8, %s6
  // Predicated region
  $region2: #{t5_loss.12} parent=0 // pred_check
    _
  $region3: #{t5_loss.12} parent=0 // pred_check_branch
    %11 = sbr.rel (0) target = $region5
  $region4: #{t5_loss.12} parent=0 // pred_region
    _
  $region5: #{t5_loss.12} parent=0 // pred_fallthru
    _
  // Predicated region
  $region6: #{t5_loss.12} parent=0 // pred_check
    _
  $region7: #{t5_loss.12} parent=0 // pred_check_branch
    %13 = sbr.rel (0) target = $region9
  $region8: #{t5_loss.12} parent=0 // pred_region
    _
  $region9: #{t5_loss.12} parent=0 // pred_fallthru
    _
  // Predicated region
  $region10: #{t5_loss.12} parent=0 // pred_check
    _
  $region11: #{t5_loss.12} parent=0 // pred_check_branch
    %15 = sbr.rel (0) target = $region13
  $region12: #{t5_loss.12} parent=0 // pred_region
    _
  $region13: #{t5_loss.12} parent=0 // pred_fallthru
    _
  // Predicated region
  $region14: #{t5_loss.12} parent=0 // pred_check
    _
  $region15: #{t5_loss.12} parent=0 // pred_check_branch
    %17 = sbr.rel (0) target = $region17
  $region16: #{t5_loss.12} parent=0 // pred_region
    _
  $region17: #{t5_loss.12} parent=0 // pred_fallthru
    _
  // Predicated region
  $region18: #{t5_loss.12} parent=0 // pred_check
    _
  $region19: #{t5_loss.12} parent=0 // pred_check_branch
    %19 = sbr.rel (0) target = $region21
  $region20: #{t5_loss.12} parent=0 // pred_region
    _
  $region21: #{t5_loss.12} parent=0 // pred_fallthru
    _
  %v21 = vld [vmem:[%s0] sm:$0xff]
  %v22 = vld [vmem:[%s0 + $0x8] sm:$0xff]
  %v23 = vld [vmem:[%s0 + $0x10] sm:$0xff]
  %v24 = vld [vmem:[%s0 + $0x18] sm:$0xff]
  %v25 = vld [vmem:[%s0 + $0x20] sm:$0xff]
  %v26 = vld [vmem:[%s0 + $0x28] sm:$0xff]
  %v27 = vld [vmem:[%s0 + $0x30] sm:$0xff]
  %v28 = vld [vmem:[%s0 + $0x38] sm:$0xff]
  %v29 = vpack.c.bf16 %v21, %v21
  %v30 = vpack.c.bf16 %v22, %v22
  %v31 = vpack.c.bf16 %v23, %v23
  %v32 = vpack.c.bf16 %v24, %v24
  %v33 = vpack.c.bf16 %v25, %v25
  %v34 = vpack.c.bf16 %v26, %v26
  %v35 = vpack.c.bf16 %v27, %v27
  %v36 = vpack.c.bf16 %v28, %v28
  %v37 = vld [vmem:[%s1] sm:$0xff]
  %v38 = vld [vmem:[%s1 + $0x8] sm:$0xff]
  %v39 = vld [vmem:[%s1 + $0x10] sm:$0xff]
  %v40 = vld [vmem:[%s1 + $0x18] sm:$0xff]
  %v41 = vld [vmem:[%s1 + $0x20] sm:$0xff]
  %v42 = vld [vmem:[%s1 + $0x28] sm:$0xff]
  %v43 = vld [vmem:[%s1 + $0x30] sm:$0xff]
  %v44 = vld [vmem:[%s1 + $0x38] sm:$0xff]
  %v45 = vpack.c.bf16 %v37, %v37
  %v46 = vpack.c.bf16 %v38, %v38
  %v47 = vpack.c.bf16 %v39, %v39
  %v48 = vpack.c.bf16 %v40, %v40
  %v49 = vpack.c.bf16 %v41, %v41
  %v50 = vpack.c.bf16 %v42, %v42
  %v51 = vpack.c.bf16 %v43, %v43
  %v52 = vpack.c.bf16 %v44, %v44
  %v53 = vld [vmem:[%s2] sm:$0xff]
  %v54 = vld [vmem:[%s2 + $0x8] sm:$0xff]
  %v55 = vld [vmem:[%s2 + $0x10] sm:$0xff]
  %v56 = vld [vmem:[%s2 + $0x18] sm:$0xff]
  %v57 = vld [vmem:[%s2 + $0x20] sm:$0xff]
  %v58 = vld [vmem:[%s2 + $0x28] sm:$0xff]
  %v59 = vld [vmem:[%s2 + $0x30] sm:$0xff]
  %v60 = vld [vmem:[%s2 + $0x38] sm:$0xff]
  %v61 = vpack.c.bf16 %v53, %v53
  %v62 = vpack.c.bf16 %v54, %v54
  %v63 = vpack.c.bf16 %v55, %v55
  %v64 = vpack.c.bf16 %v56, %v56
  %v65 = vpack.c.bf16 %v57, %v57
  %v66 = vpack.c.bf16 %v58, %v58
  %v67 = vpack.c.bf16 %v59, %v59
  %v68 = vpack.c.bf16 %v60, %v60
  %v69 = vld [vmem:[%s4] sm:$0xff]
  %v70 = vld [vmem:[%s4 + $0x8] sm:$0xff]
  %v71 = vld [vmem:[%s3] sm:$0xff]
  %v72 = vld [vmem:[%s3 + $0x8] sm:$0xff]
  %v73 = vld [vmem:[%s3 + $0x10] sm:$0xff]
  %v74 = vld [vmem:[%s3 + $0x18] sm:$0xff]
  %v75 = vadd.f32 %v69, %v71
  %v76 = vadd.f32 %v69, %v72
  %v77 = vadd.f32 %v69, %v73
  %v78 = vadd.f32 %v69, %v74
  %v79 = vadd.f32 %v70, %v71
  %v80 = vadd.f32 %v70, %v72
  %v81 = vadd.f32 %v70, %v73
  %v82 = vadd.f32 %v70, %v74
  %vm83 = vcmask 64512
  %v85 = vsel %vm83, %v29, 0
  %v88 = vsel %vm83, %v45, 0
  %90 = vmatprep.subr.bf16.mxu0 0
  %91 = vmatpush1.bf16.xpose.msra.mxu0 0
  %92 = vmatprep.subr.bf16.mxu0 0
  %93 = vmatpush1.bf16.xpose.msra.mxu0 0
  %94 = vmatprep.subr.bf16.mxu0 0
  %95 = vmatpush1.bf16.xpose.msra.mxu0 0
  %96 = vmatprep.subr.bf16.mxu0 0
  %97 = vmatpush1.bf16.xpose.msra.mxu0 0
  %98 = vmatprep.subr.bf16.mxu0 0
  %99 = vmatpush1.bf16.xpose.msra.mxu0 0
  %100 = vmatprep.subr.bf16.mxu0 0
  %101 = vmatpush1.bf16.xpose.msra.mxu0 0
  %102 = vmatprep.subr.bf16.mxu0 0
  %103 = vmatpush1.bf16.xpose.msra.mxu0 0
  %104 = vmatprep.subr.bf16.mxu0 0
  %105 = vmatpush1.bf16.xpose.msra.mxu0 %v88
  %106 = vmatprep.subr.bf16.mxu0 0
  %107 = vmatpush2.bf16.xpose.msra.mxu0 0
  %108 = vmatprep.subr.bf16.mxu0 0
  %109 = vmatpush2.bf16.xpose.msra.mxu0 0
  %110 = vmatprep.subr.bf16.mxu0 0
  %111 = vmatpush2.bf16.xpose.msra.mxu0 0
  %112 = vmatprep.subr.bf16.mxu0 0
  %113 = vmatpush2.bf16.xpose.msra.mxu0 0
  %114 = vmatprep.subr.bf16.mxu0 0
  %115 = vmatpush2.bf16.xpose.msra.mxu0 0
  %116 = vmatprep.subr.bf16.mxu0 0
  %117 = vmatpush2.bf16.xpose.msra.mxu0 0
  %118 = vmatprep.subr.bf16.mxu0 0
  %119 = vmatpush2.bf16.xpose.msra.mxu0 0
  %120 = vmatprep.subr.bf16.mxu0 0
  %121 = vmatpush2.bf16.xpose.msra.mxu0 0
  %122 = vmatprep.mubr.bf16.mxu0 0
  %123 = vmatmul.mubr.bf16.gmra.mxu0 %v85
  %v124 = vpop.f32.mrf.mxu0
  %v125 = vadd.f32 %v75, %v124
  %v126 = vpop.f32.mrf.mxu0
  %v127 = vpop.f32.mrf.mxu0
  %v128 = vpop.f32.mrf.mxu0
  %129 = vdwg.mxu0
  %v131 = vsel %vm83, %v30, 0
  %v134 = vsel %vm83, %v46, 0
  %136 = vmatprep.subr.bf16.mxu0 0
  %137 = vmatpush1.bf16.xpose.msra.mxu0 0
  %138 = vmatprep.subr.bf16.mxu0 0
  %139 = vmatpush1.bf16.xpose.msra.mxu0 0
  %140 = vmatprep.subr.bf16.mxu0 0
  %141 = vmatpush1.bf16.xpose.msra.mxu0 0
  %142 = vmatprep.subr.bf16.mxu0 0
  %143 = vmatpush1.bf16.xpose.msra.mxu0 0
  %144 = vmatprep.subr.bf16.mxu0 0
  %145 = vmatpush1.bf16.xpose.msra.mxu0 0
  %146 = vmatprep.subr.bf16.mxu0 0
  %147 = vmatpush1.bf16.xpose.msra.mxu0 0
  %148 = vmatprep.subr.bf16.mxu0 0
  %149 = vmatpush1.bf16.xpose.msra.mxu0 0
  %150 = vmatprep.subr.bf16.mxu0 0
  %151 = vmatpush1.bf16.xpose.msra.mxu0 %v134
  %152 = vmatprep.subr.bf16.mxu0 0
  %153 = vmatpush2.bf16.xpose.msra.mxu0 0
  %154 = vmatprep.subr.bf16.mxu0 0
  %155 = vmatpush2.bf16.xpose.msra.mxu0 0
  %156 = vmatprep.subr.bf16.mxu0 0
  %157 = vmatpush2.bf16.xpose.msra.mxu0 0
  %158 = vmatprep.subr.bf16.mxu0 0
  %159 = vmatpush2.bf16.xpose.msra.mxu0 0
  %160 = vmatprep.subr.bf16.mxu0 0
  %161 = vmatpush2.bf16.xpose.msra.mxu0 0
  %162 = vmatprep.subr.bf16.mxu0 0
  %163 = vmatpush2.bf16.xpose.msra.mxu0 0
  %164 = vmatprep.subr.bf16.mxu0 0
  %165 = vmatpush2.bf16.xpose.msra.mxu0 0
  %166 = vmatprep.subr.bf16.mxu0 0
  %167 = vmatpush2.bf16.xpose.msra.mxu0 0
  %168 = vmatprep.mubr.bf16.mxu0 0
  %169 = vmatmul.mubr.bf16.gmra.mxu0 %v131
  %v170 = vpop.f32.mrf.mxu0
  %v171 = vadd.f32 %v76, %v170
  %v172 = vpop.f32.mrf.mxu0
  %v173 = vpop.f32.mrf.mxu0
  %v174 = vpop.f32.mrf.mxu0
  %175 = vdwg.mxu0
  %v177 = vsel %vm83, %v31, 0
  %v180 = vsel %vm83, %v47, 0
  %182 = vmatprep.subr.bf16.mxu0 0
  %183 = vmatpush1.bf16.xpose.msra.mxu0 0
  %184 = vmatprep.subr.bf16.mxu0 0
  %185 = vmatpush1.bf16.xpose.msra.mxu0 0
  %186 = vmatprep.subr.bf16.mxu0 0
  %187 = vmatpush1.bf16.xpose.msra.mxu0 0
  %188 = vmatprep.subr.bf16.mxu0 0
  %189 = vmatpush1.bf16.xpose.msra.mxu0 0
  %190 = vmatprep.subr.bf16.mxu0 0
  %191 = vmatpush1.bf16.xpose.msra.mxu0 0
  %192 = vmatprep.subr.bf16.mxu0 0
  %193 = vmatpush1.bf16.xpose.msra.mxu0 0
  %194 = vmatprep.subr.bf16.mxu0 0
  %195 = vmatpush1.bf16.xpose.msra.mxu0 0
  %196 = vmatprep.subr.bf16.mxu0 0
  %197 = vmatpush1.bf16.xpose.msra.mxu0 %v180
  %198 = vmatprep.subr.bf16.mxu0 0
  %199 = vmatpush2.bf16.xpose.msra.mxu0 0
  %200 = vmatprep.subr.bf16.mxu0 0
  %201 = vmatpush2.bf16.xpose.msra.mxu0 0
  %202 = vmatprep.subr.bf16.mxu0 0
  %203 = vmatpush2.bf16.xpose.msra.mxu0 0
  %204 = vmatprep.subr.bf16.mxu0 0
  %205 = vmatpush2.bf16.xpose.msra.mxu0 0
  %206 = vmatprep.subr.bf16.mxu0 0
  %207 = vmatpush2.bf16.xpose.msra.mxu0 0
  %208 = vmatprep.subr.bf16.mxu0 0
  %209 = vmatpush2.bf16.xpose.msra.mxu0 0
  %210 = vmatprep.subr.bf16.mxu0 0
  %211 = vmatpush2.bf16.xpose.msra.mxu0 0
  %212 = vmatprep.subr.bf16.mxu0 0
  %213 = vmatpush2.bf16.xpose.msra.mxu0 0
  %214 = vmatprep.mubr.bf16.mxu0 0
  %215 = vmatmul.mubr.bf16.gmra.mxu0 %v177
  %v216 = vpop.f32.mrf.mxu0
  %v217 = vadd.f32 %v77, %v216
  %v218 = vpop.f32.mrf.mxu0
  %v219 = vpop.f32.mrf.mxu0
  %v220 = vpop.f32.mrf.mxu0
  %221 = vdwg.mxu0
  %v223 = vsel %vm83, %v32, 0
  %v226 = vsel %vm83, %v48, 0
  %228 = vmatprep.subr.bf16.mxu0 0
  %229 = vmatpush1.bf16.xpose.msra.mxu0 0
  %230 = vmatprep.subr.bf16.mxu0 0
  %231 = vmatpush1.bf16.xpose.msra.mxu0 0
  %232 = vmatprep.subr.bf16.mxu0 0
  %233 = vmatpush1.bf16.xpose.msra.mxu0 0
  %234 = vmatprep.subr.bf16.mxu0 0
  %235 = vmatpush1.bf16.xpose.msra.mxu0 0
  %236 = vmatprep.subr.bf16.mxu0 0
  %237 = vmatpush1.bf16.xpose.msra.mxu0 0
  %238 = vmatprep.subr.bf16.mxu0 0
  %239 = vmatpush1.bf16.xpose.msra.mxu0 0
  %240 = vmatprep.subr.bf16.mxu0 0
  %241 = vmatpush1.bf16.xpose.msra.mxu0 0
  %242 = vmatprep.subr.bf16.mxu0 0
  %243 = vmatpush1.bf16.xpose.msra.mxu0 %v226
  %244 = vmatprep.subr.bf16.mxu0 0
  %245 = vmatpush2.bf16.xpose.msra.mxu0 0
  %246 = vmatprep.subr.bf16.mxu0 0
  %247 = vmatpush2.bf16.xpose.msra.mxu0 0
  %248 = vmatprep.subr.bf16.mxu0 0
  %249 = vmatpush2.bf16.xpose.msra.mxu0 0
  %250 = vmatprep.subr.bf16.mxu0 0
  %251 = vmatpush2.bf16.xpose.msra.mxu0 0
  %252 = vmatprep.subr.bf16.mxu0 0
  %253 = vmatpush2.bf16.xpose.msra.mxu0 0
  %254 = vmatprep.subr.bf16.mxu0 0
  %255 = vmatpush2.bf16.xpose.msra.mxu0 0
  %256 = vmatprep.subr.bf16.mxu0 0
  %257 = vmatpush2.bf16.xpose.msra.mxu0 0
  %258 = vmatprep.subr.bf16.mxu0 0
  %259 = vmatpush2.bf16.xpose.msra.mxu0 0
  %260 = vmatprep.mubr.bf16.mxu0 0
  %261 = vmatmul.mubr.bf16.gmra.mxu0 %v223
  %v262 = vpop.f32.mrf.mxu0
  %v263 = vadd.f32 %v78, %v262
  %v264 = vpop.f32.mrf.mxu0
  %v265 = vpop.f32.mrf.mxu0
  %v266 = vpop.f32.mrf.mxu0
  %267 = vdwg.mxu0
  %v269 = vsel %vm83, %v33, 0
  %v272 = vsel %vm83, %v49, 0
  %274 = vmatprep.subr.bf16.mxu0 0
  %275 = vmatpush1.bf16.xpose.msra.mxu0 0
  %276 = vmatprep.subr.bf16.mxu0 0
  %277 = vmatpush1.bf16.xpose.msra.mxu0 0
  %278 = vmatprep.subr.bf16.mxu0 0
  %279 = vmatpush1.bf16.xpose.msra.mxu0 0
  %280 = vmatprep.subr.bf16.mxu0 0
  %281 = vmatpush1.bf16.xpose.msra.mxu0 0
  %282 = vmatprep.subr.bf16.mxu0 0
  %283 = vmatpush1.bf16.xpose.msra.mxu0 0
  %284 = vmatprep.subr.bf16.mxu0 0
  %285 = vmatpush1.bf16.xpose.msra.mxu0 0
  %286 = vmatprep.subr.bf16.mxu0 0
  %287 = vmatpush1.bf16.xpose.msra.mxu0 0
  %288 = vmatprep.subr.bf16.mxu0 0
  %289 = vmatpush1.bf16.xpose.msra.mxu0 %v272
  %290 = vmatprep.subr.bf16.mxu0 0
  %291 = vmatpush2.bf16.xpose.msra.mxu0 0
  %292 = vmatprep.subr.bf16.mxu0 0
  %293 = vmatpush2.bf16.xpose.msra.mxu0 0
  %294 = vmatprep.subr.bf16.mxu0 0
  %295 = vmatpush2.bf16.xpose.msra.mxu0 0
  %296 = vmatprep.subr.bf16.mxu0 0
  %297 = vmatpush2.bf16.xpose.msra.mxu0 0
  %298 = vmatprep.subr.bf16.mxu0 0
  %299 = vmatpush2.bf16.xpose.msra.mxu0 0
  %300 = vmatprep.subr.bf16.mxu0 0
  %301 = vmatpush2.bf16.xpose.msra.mxu0 0
  %302 = vmatprep.subr.bf16.mxu0 0
  %303 = vmatpush2.bf16.xpose.msra.mxu0 0
  %304 = vmatprep.subr.bf16.mxu0 0
  %305 = vmatpush2.bf16.xpose.msra.mxu0 0
  %306 = vmatprep.mubr.bf16.mxu0 0
  %307 = vmatmul.mubr.bf16.gmra.mxu0 %v269
  %v308 = vpop.f32.mrf.mxu0
  %v309 = vadd.f32 %v79, %v308
  %v310 = vpop.f32.mrf.mxu0
  %v311 = vpop.f32.mrf.mxu0
  %v312 = vpop.f32.mrf.mxu0
  %313 = vdwg.mxu0
  %v315 = vsel %vm83, %v34, 0
  %v318 = vsel %vm83, %v50, 0
  %320 = vmatprep.subr.bf16.mxu0 0
  %321 = vmatpush1.bf16.xpose.msra.mxu0 0
  %322 = vmatprep.subr.bf16.mxu0 0
  %323 = vmatpush1.bf16.xpose.msra.mxu0 0
  %324 = vmatprep.subr.bf16.mxu0 0
  %325 = vmatpush1.bf16.xpose.msra.mxu0 0
  %326 = vmatprep.subr.bf16.mxu0 0
  %327 = vmatpush1.bf16.xpose.msra.mxu0 0
  %328 = vmatprep.subr.bf16.mxu0 0
  %329 = vmatpush1.bf16.xpose.msra.mxu0 0
  %330 = vmatprep.subr.bf16.mxu0 0
  %331 = vmatpush1.bf16.xpose.msra.mxu0 0
  %332 = vmatprep.subr.bf16.mxu0 0
  %333 = vmatpush1.bf16.xpose.msra.mxu0 0
  %334 = vmatprep.subr.bf16.mxu0 0
  %335 = vmatpush1.bf16.xpose.msra.mxu0 %v318
  %336 = vmatprep.subr.bf16.mxu0 0
  %337 = vmatpush2.bf16.xpose.msra.mxu0 0
  %338 = vmatprep.subr.bf16.mxu0 0
  %339 = vmatpush2.bf16.xpose.msra.mxu0 0
  %340 = vmatprep.subr.bf16.mxu0 0
  %341 = vmatpush2.bf16.xpose.msra.mxu0 0
  %342 = vmatprep.subr.bf16.mxu0 0
  %343 = vmatpush2.bf16.xpose.msra.mxu0 0
  %344 = vmatprep.subr.bf16.mxu0 0
  %345 = vmatpush2.bf16.xpose.msra.mxu0 0
  %346 = vmatprep.subr.bf16.mxu0 0
  %347 = vmatpush2.bf16.xpose.msra.mxu0 0
  %348 = vmatprep.subr.bf16.mxu0 0
  %349 = vmatpush2.bf16.xpose.msra.mxu0 0
  %350 = vmatprep.subr.bf16.mxu0 0
  %351 = vmatpush2.bf16.xpose.msra.mxu0 0
  %352 = vmatprep.mubr.bf16.mxu0 0
  %353 = vmatmul.mubr.bf16.gmra.mxu0 %v315
  %v354 = vpop.f32.mrf.mxu0
  %v355 = vadd.f32 %v80, %v354
  %v356 = vpop.f32.mrf.mxu0
  %v357 = vpop.f32.mrf.mxu0
  %v358 = vpop.f32.mrf.mxu0
  %359 = vdwg.mxu0
  %v361 = vsel %vm83, %v35, 0
  %v364 = vsel %vm83, %v51, 0
  %366 = vmatprep.subr.bf16.mxu0 0
  %367 = vmatpush1.bf16.xpose.msra.mxu0 0
  %368 = vmatprep.subr.bf16.mxu0 0
  %369 = vmatpush1.bf16.xpose.msra.mxu0 0
  %370 = vmatprep.subr.bf16.mxu0 0
  %371 = vmatpush1.bf16.xpose.msra.mxu0 0
  %372 = vmatprep.subr.bf16.mxu0 0
  %373 = vmatpush1.bf16.xpose.msra.mxu0 0
  %374 = vmatprep.subr.bf16.mxu0 0
  %375 = vmatpush1.bf16.xpose.msra.mxu0 0
  %376 = vmatprep.subr.bf16.mxu0 0
  %377 = vmatpush1.bf16.xpose.msra.mxu0 0
  %378 = vmatprep.subr.bf16.mxu0 0
  %379 = vmatpush1.bf16.xpose.msra.mxu0 0
  %380 = vmatprep.subr.bf16.mxu0 0
  %381 = vmatpush1.bf16.xpose.msra.mxu0 %v364
  %382 = vmatprep.subr.bf16.mxu0 0
  %383 = vmatpush2.bf16.xpose.msra.mxu0 0
  %384 = vmatprep.subr.bf16.mxu0 0
  %385 = vmatpush2.bf16.xpose.msra.mxu0 0
  %386 = vmatprep.subr.bf16.mxu0 0
  %387 = vmatpush2.bf16.xpose.msra.mxu0 0
  %388 = vmatprep.subr.bf16.mxu0 0
  %389 = vmatpush2.bf16.xpose.msra.mxu0 0
  %390 = vmatprep.subr.bf16.mxu0 0
  %391 = vmatpush2.bf16.xpose.msra.mxu0 0
  %392 = vmatprep.subr.bf16.mxu0 0
  %393 = vmatpush2.bf16.xpose.msra.mxu0 0
  %394 = vmatprep.subr.bf16.mxu0 0
  %395 = vmatpush2.bf16.xpose.msra.mxu0 0
  %396 = vmatprep.subr.bf16.mxu0 0
  %397 = vmatpush2.bf16.xpose.msra.mxu0 0
  %398 = vmatprep.mubr.bf16.mxu0 0
  %399 = vmatmul.mubr.bf16.gmra.mxu0 %v361
  %v400 = vpop.f32.mrf.mxu0
  %v401 = vadd.f32 %v81, %v400
  %v402 = vpop.f32.mrf.mxu0
  %v403 = vpop.f32.mrf.mxu0
  %v404 = vpop.f32.mrf.mxu0
  %405 = vdwg.mxu0
  %v407 = vsel %vm83, %v36, 0
  %v410 = vsel %vm83, %v52, 0
  %412 = vmatprep.subr.bf16.mxu0 0
  %413 = vmatpush1.bf16.xpose.msra.mxu0 0
  %414 = vmatprep.subr.bf16.mxu0 0
  %415 = vmatpush1.bf16.xpose.msra.mxu0 0
  %416 = vmatprep.subr.bf16.mxu0 0
  %417 = vmatpush1.bf16.xpose.msra.mxu0 0
  %418 = vmatprep.subr.bf16.mxu0 0
  %419 = vmatpush1.bf16.xpose.msra.mxu0 0
  %420 = vmatprep.subr.bf16.mxu0 0
  %421 = vmatpush1.bf16.xpose.msra.mxu0 0
  %422 = vmatprep.subr.bf16.mxu0 0
  %423 = vmatpush1.bf16.xpose.msra.mxu0 0
  %424 = vmatprep.subr.bf16.mxu0 0
  %425 = vmatpush1.bf16.xpose.msra.mxu0 0
  %426 = vmatprep.subr.bf16.mxu0 0
  %427 = vmatpush1.bf16.xpose.msra.mxu0 %v410
  %428 = vmatprep.subr.bf16.mxu0 0
  %429 = vmatpush2.bf16.xpose.msra.mxu0 0
  %430 = vmatprep.subr.bf16.mxu0 0
  %431 = vmatpush2.bf16.xpose.msra.mxu0 0
  %432 = vmatprep.subr.bf16.mxu0 0
  %433 = vmatpush2.bf16.xpose.msra.mxu0 0
  %434 = vmatprep.subr.bf16.mxu0 0
  %435 = vmatpush2.bf16.xpose.msra.mxu0 0
  %436 = vmatprep.subr.bf16.mxu0 0
  %437 = vmatpush2.bf16.xpose.msra.mxu0 0
  %438 = vmatprep.subr.bf16.mxu0 0
  %439 = vmatpush2.bf16.xpose.msra.mxu0 0
  %440 = vmatprep.subr.bf16.mxu0 0
  %441 = vmatpush2.bf16.xpose.msra.mxu0 0
  %442 = vmatprep.subr.bf16.mxu0 0
  %443 = vmatpush2.bf16.xpose.msra.mxu0 0
  %444 = vmatprep.mubr.bf16.mxu0 0
  %445 = vmatmul.mubr.bf16.gmra.mxu0 %v407
  %v446 = vpop.f32.mrf.mxu0
  %v447 = vadd.f32 %v82, %v446
  %v448 = vpop.f32.mrf.mxu0
  %v449 = vpop.f32.mrf.mxu0
  %v450 = vpop.f32.mrf.mxu0
  %451 = vdwg.mxu0
  %v452 = vsel %vm83, %v125, -inf
  %453 = vmax.xlane.f32.xlu0 %v452
  %v454 = vpop.xlane.xlu0 %453
  %v455 = vsel %vm83, %v171, -inf
  %456 = vmax.xlane.f32.xlu0 %v455
  %v457 = vpop.xlane.xlu0 %456
  %v458 = vsel %vm83, %v217, -inf
  %459 = vmax.xlane.f32.xlu0 %v458
  %v460 = vpop.xlane.xlu0 %459
  %v461 = vsel %vm83, %v263, -inf
  %462 = vmax.xlane.f32.xlu0 %v461
  %v463 = vpop.xlane.xlu0 %462
  %v464 = vsel %vm83, %v309, -inf
  %465 = vmax.xlane.f32.xlu0 %v464
  %v466 = vpop.xlane.xlu0 %465
  %v467 = vsel %vm83, %v355, -inf
  %468 = vmax.xlane.f32.xlu0 %v467
  %v469 = vpop.xlane.xlu0 %468
  %v470 = vsel %vm83, %v401, -inf
  %471 = vmax.xlane.f32.xlu0 %v470
  %v472 = vpop.xlane.xlu0 %471
  %v473 = vsel %vm83, %v447, -inf
  %474 = vmax.xlane.f32.xlu0 %v473
  %v475 = vpop.xlane.xlu0 %474
  %v476 = vsub.f32 %v125, %v454
  %v477 = vsub.f32 %v171, %v457
  %v478 = vsub.f32 %v217, %v460
  %v479 = vsub.f32 %v263, %v463
  %v480 = vsub.f32 %v309, %v466
  %v481 = vsub.f32 %v355, %v469
  %v482 = vsub.f32 %v401, %v472
  %v483 = vsub.f32 %v447, %v475
  %v484 = vmul.f32 %v476, 1.442695
  %v485 = vpow.pop %v484
  %v486 = vmul.f32 %v477, 1.442695
  %v487 = vpow.pop %v486
  %v488 = vmul.f32 %v478, 1.442695
  %v489 = vpow.pop %v488
  %v490 = vmul.f32 %v479, 1.442695
  %v491 = vpow.pop %v490
  %v492 = vmul.f32 %v480, 1.442695
  %v493 = vpow.pop %v492
  %v494 = vmul.f32 %v481, 1.442695
  %v495 = vpow.pop %v494
  %v496 = vmul.f32 %v482, 1.442695
  %v497 = vpow.pop %v496
  %v498 = vmul.f32 %v483, 1.442695
  %v499 = vpow.pop %v498
  %v500 = vsel %vm83, %v485, 0.0
  %501 = vadd.xlane.f32.xlu0 %v500
  %v502 = vpop.xlane.xlu0 %501
  %v503 = vsel %vm83, %v487, 0.0
  %504 = vadd.xlane.f32.xlu0 %v503
  %v505 = vpop.xlane.xlu0 %504
  %v506 = vsel %vm83, %v489, 0.0
  %507 = vadd.xlane.f32.xlu0 %v506
  %v508 = vpop.xlane.xlu0 %507
  %v509 = vsel %vm83, %v491, 0.0
  %510 = vadd.xlane.f32.xlu0 %v509
  %v511 = vpop.xlane.xlu0 %510
  %v512 = vsel %vm83, %v493, 0.0
  %513 = vadd.xlane.f32.xlu0 %v512
  %v514 = vpop.xlane.xlu0 %513
  %v515 = vsel %vm83, %v495, 0.0
  %516 = vadd.xlane.f32.xlu0 %v515
  %v517 = vpop.xlane.xlu0 %516
  %v518 = vsel %vm83, %v497, 0.0
  %519 = vadd.xlane.f32.xlu0 %v518
  %v520 = vpop.xlane.xlu0 %519
  %v521 = vsel %vm83, %v499, 0.0
  %522 = vadd.xlane.f32.xlu0 %v521
  %v523 = vpop.xlane.xlu0 %522
  %v524 = vrcp.pop %v502
  %v525 = vrcp.pop %v505
  %v526 = vrcp.pop %v508
  %v527 = vrcp.pop %v511
  %v528 = vrcp.pop %v514
  %v529 = vrcp.pop %v517
  %v530 = vrcp.pop %v520
  %v531 = vrcp.pop %v523
  %v532 = vmul.f32 %v485, %v524
  %v533 = vmul.f32 %v487, %v525
  %v534 = vmul.f32 %v489, %v526
  %v535 = vmul.f32 %v491, %v527
  %v536 = vmul.f32 %v493, %v528
  %v537 = vmul.f32 %v495, %v529
  %v538 = vmul.f32 %v497, %v530
  %v539 = vmul.f32 %v499, %v531
  %v540 = vpack.c.bf16 %v532, %v532
  %v541 = vpack.c.bf16 %v533, %v533
  %v542 = vpack.c.bf16 %v534, %v534
  %v543 = vpack.c.bf16 %v535, %v535
  %v544 = vpack.c.bf16 %v536, %v536
  %v545 = vpack.c.bf16 %v537, %v537
  %v546 = vpack.c.bf16 %v538, %v538
  %v547 = vpack.c.bf16 %v539, %v539
  %v549 = vsel %vm83, %v540, 0
  %vm551 = vcmask 1043456
  %v553 = vsel %vm551, %v61, 0
  %555 = vmatprep.subr.bf16.mxu0 0
  %556 = vmatpush1.bf16.msra.mxu0 0
  %557 = vmatprep.subr.bf16.mxu0 0
  %558 = vmatpush1.bf16.msra.mxu0 0
  %559 = vmatprep.subr.bf16.mxu0 0
  %560 = vmatpush1.bf16.msra.mxu0 0
  %561 = vmatprep.subr.bf16.mxu0 0
  %562 = vmatpush1.bf16.msra.mxu0 0
  %563 = vmatprep.subr.bf16.mxu0 0
  %564 = vmatpush1.bf16.msra.mxu0 0
  %565 = vmatprep.subr.bf16.mxu0 0
  %566 = vmatpush1.bf16.msra.mxu0 0
  %567 = vmatprep.subr.bf16.mxu0 0
  %568 = vmatpush1.bf16.msra.mxu0 0
  %569 = vmatprep.subr.bf16.mxu0 0
  %570 = vmatpush1.bf16.msra.mxu0 %v553
  %571 = vmatprep.subr.bf16.mxu0 0
  %572 = vmatpush2.bf16.msra.mxu0 0
  %573 = vmatprep.subr.bf16.mxu0 0
  %574 = vmatpush2.bf16.msra.mxu0 0
  %575 = vmatprep.subr.bf16.mxu0 0
  %576 = vmatpush2.bf16.msra.mxu0 0
  %577 = vmatprep.subr.bf16.mxu0 0
  %578 = vmatpush2.bf16.msra.mxu0 0
  %579 = vmatprep.subr.bf16.mxu0 0
  %580 = vmatpush2.bf16.msra.mxu0 0
  %581 = vmatprep.subr.bf16.mxu0 0
  %582 = vmatpush2.bf16.msra.mxu0 0
  %583 = vmatprep.subr.bf16.mxu0 0
  %584 = vmatpush2.bf16.msra.mxu0 0
  %585 = vmatprep.subr.bf16.mxu0 0
  %586 = vmatpush2.bf16.msra.mxu0 0
  %587 = vmatprep.mubr.bf16.mxu0 0
  %588 = vmatmul.mubr.bf16.gmra.mxu0 %v549
  %v589 = vpop.f32.mrf.mxu0
  %v590 = vadd.f32 0.0, %v589
  %v591 = vpop.f32.mrf.mxu0
  %v592 = vpop.f32.mrf.mxu0
  %v593 = vpop.f32.mrf.mxu0
  %594 = vdwg.mxu0
  %v596 = vsel %vm83, %v541, 0
  %v599 = vsel %vm551, %v62, 0
  %601 = vmatprep.subr.bf16.mxu0 0
  %602 = vmatpush1.bf16.msra.mxu0 0
  %603 = vmatprep.subr.bf16.mxu0 0
  %604 = vmatpush1.bf16.msra.mxu0 0
  %605 = vmatprep.subr.bf16.mxu0 0
  %606 = vmatpush1.bf16.msra.mxu0 0
  %607 = vmatprep.subr.bf16.mxu0 0
  %608 = vmatpush1.bf16.msra.mxu0 0
  %609 = vmatprep.subr.bf16.mxu0 0
  %610 = vmatpush1.bf16.msra.mxu0 0
  %611 = vmatprep.subr.bf16.mxu0 0
  %612 = vmatpush1.bf16.msra.mxu0 0
  %613 = vmatprep.subr.bf16.mxu0 0
  %614 = vmatpush1.bf16.msra.mxu0 0
  %615 = vmatprep.subr.bf16.mxu0 0
  %616 = vmatpush1.bf16.msra.mxu0 %v599
  %617 = vmatprep.subr.bf16.mxu0 0
  %618 = vmatpush2.bf16.msra.mxu0 0
  %619 = vmatprep.subr.bf16.mxu0 0
  %620 = vmatpush2.bf16.msra.mxu0 0
  %621 = vmatprep.subr.bf16.mxu0 0
  %622 = vmatpush2.bf16.msra.mxu0 0
  %623 = vmatprep.subr.bf16.mxu0 0
  %624 = vmatpush2.bf16.msra.mxu0 0
  %625 = vmatprep.subr.bf16.mxu0 0
  %626 = vmatpush2.bf16.msra.mxu0 0
  %627 = vmatprep.subr.bf16.mxu0 0
  %628 = vmatpush2.bf16.msra.mxu0 0
  %629 = vmatprep.subr.bf16.mxu0 0
  %630 = vmatpush2.bf16.msra.mxu0 0
  %631 = vmatprep.subr.bf16.mxu0 0
  %632 = vmatpush2.bf16.msra.mxu0 0
  %633 = vmatprep.mubr.bf16.mxu0 0
  %634 = vmatmul.mubr.bf16.gmra.mxu0 %v596
  %v635 = vpop.f32.mrf.mxu0
  %v636 = vadd.f32 0.0, %v635
  %v637 = vpop.f32.mrf.mxu0
  %v638 = vpop.f32.mrf.mxu0
  %v639 = vpop.f32.mrf.mxu0
  %640 = vdwg.mxu0
  %v642 = vsel %vm83, %v542, 0
  %v645 = vsel %vm551, %v63, 0
  %647 = vmatprep.subr.bf16.mxu0 0
  %648 = vmatpush1.bf16.msra.mxu0 0
  %649 = vmatprep.subr.bf16.mxu0 0
  %650 = vmatpush1.bf16.msra.mxu0 0
  %651 = vmatprep.subr.bf16.mxu0 0
  %652 = vmatpush1.bf16.msra.mxu0 0
  %653 = vmatprep.subr.bf16.mxu0 0
  %654 = vmatpush1.bf16.msra.mxu0 0
  %655 = vmatprep.subr.bf16.mxu0 0
  %656 = vmatpush1.bf16.msra.mxu0 0
  %657 = vmatprep.subr.bf16.mxu0 0
  %658 = vmatpush1.bf16.msra.mxu0 0
  %659 = vmatprep.subr.bf16.mxu0 0
  %660 = vmatpush1.bf16.msra.mxu0 0
  %661 = vmatprep.subr.bf16.mxu0 0
  %662 = vmatpush1.bf16.msra.mxu0 %v645
  %663 = vmatprep.subr.bf16.mxu0 0
  %664 = vmatpush2.bf16.msra.mxu0 0
  %665 = vmatprep.subr.bf16.mxu0 0
  %666 = vmatpush2.bf16.msra.mxu0 0
  %667 = vmatprep.subr.bf16.mxu0 0
  %668 = vmatpush2.bf16.msra.mxu0 0
  %669 = vmatprep.subr.bf16.mxu0 0
  %670 = vmatpush2.bf16.msra.mxu0 0
  %671 = vmatprep.subr.bf16.mxu0 0
  %672 = vmatpush2.bf16.msra.mxu0 0
  %673 = vmatprep.subr.bf16.mxu0 0
  %674 = vmatpush2.bf16.msra.mxu0 0
  %675 = vmatprep.subr.bf16.mxu0 0
  %676 = vmatpush2.bf16.msra.mxu0 0
  %677 = vmatprep.subr.bf16.mxu0 0
  %678 = vmatpush2.bf16.msra.mxu0 0
  %679 = vmatprep.mubr.bf16.mxu0 0
  %680 = vmatmul.mubr.bf16.gmra.mxu0 %v642
  %v681 = vpop.f32.mrf.mxu0
  %v682 = vadd.f32 0.0, %v681
  %v683 = vpop.f32.mrf.mxu0
  %v684 = vpop.f32.mrf.mxu0
  %v685 = vpop.f32.mrf.mxu0
  %686 = vdwg.mxu0
  %v688 = vsel %vm83, %v543, 0
  %v691 = vsel %vm551, %v64, 0
  %693 = vmatprep.subr.bf16.mxu0 0
  %694 = vmatpush1.bf16.msra.mxu0 0
  %695 = vmatprep.subr.bf16.mxu0 0
  %696 = vmatpush1.bf16.msra.mxu0 0
  %697 = vmatprep.subr.bf16.mxu0 0
  %698 = vmatpush1.bf16.msra.mxu0 0
  %699 = vmatprep.subr.bf16.mxu0 0
  %700 = vmatpush1.bf16.msra.mxu0 0
  %701 = vmatprep.subr.bf16.mxu0 0
  %702 = vmatpush1.bf16.msra.mxu0 0
  %703 = vmatprep.subr.bf16.mxu0 0
  %704 = vmatpush1.bf16.msra.mxu0 0
  %705 = vmatprep.subr.bf16.mxu0 0
  %706 = vmatpush1.bf16.msra.mxu0 0
  %707 = vmatprep.subr.bf16.mxu0 0
  %708 = vmatpush1.bf16.msra.mxu0 %v691
  %709 = vmatprep.subr.bf16.mxu0 0
  %710 = vmatpush2.bf16.msra.mxu0 0
  %711 = vmatprep.subr.bf16.mxu0 0
  %712 = vmatpush2.bf16.msra.mxu0 0
  %713 = vmatprep.subr.bf16.mxu0 0
  %714 = vmatpush2.bf16.msra.mxu0 0
  %715 = vmatprep.subr.bf16.mxu0 0
  %716 = vmatpush2.bf16.msra.mxu0 0
  %717 = vmatprep.subr.bf16.mxu0 0
  %718 = vmatpush2.bf16.msra.mxu0 0
  %719 = vmatprep.subr.bf16.mxu0 0
  %720 = vmatpush2.bf16.msra.mxu0 0
  %721 = vmatprep.subr.bf16.mxu0 0
  %722 = vmatpush2.bf16.msra.mxu0 0
  %723 = vmatprep.subr.bf16.mxu0 0
  %724 = vmatpush2.bf16.msra.mxu0 0
  %725 = vmatprep.mubr.bf16.mxu0 0
  %726 = vmatmul.mubr.bf16.gmra.mxu0 %v688
  %v727 = vpop.f32.mrf.mxu0
  %v728 = vadd.f32 0.0, %v727
  %v729 = vpop.f32.mrf.mxu0
  %v730 = vpop.f32.mrf.mxu0
  %v731 = vpop.f32.mrf.mxu0
  %732 = vdwg.mxu0
  %v734 = vsel %vm83, %v544, 0
  %v737 = vsel %vm551, %v65, 0
  %739 = vmatprep.subr.bf16.mxu0 0
  %740 = vmatpush1.bf16.msra.mxu0 0
  %741 = vmatprep.subr.bf16.mxu0 0
  %742 = vmatpush1.bf16.msra.mxu0 0
  %743 = vmatprep.subr.bf16.mxu0 0
  %744 = vmatpush1.bf16.msra.mxu0 0
  %745 = vmatprep.subr.bf16.mxu0 0
  %746 = vmatpush1.bf16.msra.mxu0 0
  %747 = vmatprep.subr.bf16.mxu0 0
  %748 = vmatpush1.bf16.msra.mxu0 0
  %749 = vmatprep.subr.bf16.mxu0 0
  %750 = vmatpush1.bf16.msra.mxu0 0
  %751 = vmatprep.subr.bf16.mxu0 0
  %752 = vmatpush1.bf16.msra.mxu0 0
  %753 = vmatprep.subr.bf16.mxu0 0
  %754 = vmatpush1.bf16.msra.mxu0 %v737
  %755 = vmatprep.subr.bf16.mxu0 0
  %756 = vmatpush2.bf16.msra.mxu0 0
  %757 = vmatprep.subr.bf16.mxu0 0
  %758 = vmatpush2.bf16.msra.mxu0 0
  %759 = vmatprep.subr.bf16.mxu0 0
  %760 = vmatpush2.bf16.msra.mxu0 0
  %761 = vmatprep.subr.bf16.mxu0 0
  %762 = vmatpush2.bf16.msra.mxu0 0
  %763 = vmatprep.subr.bf16.mxu0 0
  %764 = vmatpush2.bf16.msra.mxu0 0
  %765 = vmatprep.subr.bf16.mxu0 0
  %766 = vmatpush2.bf16.msra.mxu0 0
  %767 = vmatprep.subr.bf16.mxu0 0
  %768 = vmatpush2.bf16.msra.mxu0 0
  %769 = vmatprep.subr.bf16.mxu0 0
  %770 = vmatpush2.bf16.msra.mxu0 0
  %771 = vmatprep.mubr.bf16.mxu0 0
  %772 = vmatmul.mubr.bf16.gmra.mxu0 %v734
  %v773 = vpop.f32.mrf.mxu0
  %v774 = vadd.f32 0.0, %v773
  %v775 = vpop.f32.mrf.mxu0
  %v776 = vpop.f32.mrf.mxu0
  %v777 = vpop.f32.mrf.mxu0
  %778 = vdwg.mxu0
  %v780 = vsel %vm83, %v545, 0
  %v783 = vsel %vm551, %v66, 0
  %785 = vmatprep.subr.bf16.mxu0 0
  %786 = vmatpush1.bf16.msra.mxu0 0
  %787 = vmatprep.subr.bf16.mxu0 0
  %788 = vmatpush1.bf16.msra.mxu0 0
  %789 = vmatprep.subr.bf16.mxu0 0
  %790 = vmatpush1.bf16.msra.mxu0 0
  %791 = vmatprep.subr.bf16.mxu0 0
  %792 = vmatpush1.bf16.msra.mxu0 0
  %793 = vmatprep.subr.bf16.mxu0 0
  %794 = vmatpush1.bf16.msra.mxu0 0
  %795 = vmatprep.subr.bf16.mxu0 0
  %796 = vmatpush1.bf16.msra.mxu0 0
  %797 = vmatprep.subr.bf16.mxu0 0
  %798 = vmatpush1.bf16.msra.mxu0 0
  %799 = vmatprep.subr.bf16.mxu0 0
  %800 = vmatpush1.bf16.msra.mxu0 %v783
  %801 = vmatprep.subr.bf16.mxu0 0
  %802 = vmatpush2.bf16.msra.mxu0 0
  %803 = vmatprep.subr.bf16.mxu0 0
  %804 = vmatpush2.bf16.msra.mxu0 0
  %805 = vmatprep.subr.bf16.mxu0 0
  %806 = vmatpush2.bf16.msra.mxu0 0
  %807 = vmatprep.subr.bf16.mxu0 0
  %808 = vmatpush2.bf16.msra.mxu0 0
  %809 = vmatprep.subr.bf16.mxu0 0
  %810 = vmatpush2.bf16.msra.mxu0 0
  %811 = vmatprep.subr.bf16.mxu0 0
  %812 = vmatpush2.bf16.msra.mxu0 0
  %813 = vmatprep.subr.bf16.mxu0 0
  %814 = vmatpush2.bf16.msra.mxu0 0
  %815 = vmatprep.subr.bf16.mxu0 0
  %816 = vmatpush2.bf16.msra.mxu0 0
  %817 = vmatprep.mubr.bf16.mxu0 0
  %818 = vmatmul.mubr.bf16.gmra.mxu0 %v780
  %v819 = vpop.f32.mrf.mxu0
  %v820 = vadd.f32 0.0, %v819
  %v821 = vpop.f32.mrf.mxu0
  %v822 = vpop.f32.mrf.mxu0
  %v823 = vpop.f32.mrf.mxu0
  %824 = vdwg.mxu0
  %v826 = vsel %vm83, %v546, 0
  %v829 = vsel %vm551, %v67, 0
  %831 = vmatprep.subr.bf16.mxu0 0
  %832 = vmatpush1.bf16.msra.mxu0 0
  %833 = vmatprep.subr.bf16.mxu0 0
  %834 = vmatpush1.bf16.msra.mxu0 0
  %835 = vmatprep.subr.bf16.mxu0 0
  %836 = vmatpush1.bf16.msra.mxu0 0
  %837 = vmatprep.subr.bf16.mxu0 0
  %838 = vmatpush1.bf16.msra.mxu0 0
  %839 = vmatprep.subr.bf16.mxu0 0
  %840 = vmatpush1.bf16.msra.mxu0 0
  %841 = vmatprep.subr.bf16.mxu0 0
  %842 = vmatpush1.bf16.msra.mxu0 0
  %843 = vmatprep.subr.bf16.mxu0 0
  %844 = vmatpush1.bf16.msra.mxu0 0
  %845 = vmatprep.subr.bf16.mxu0 0
  %846 = vmatpush1.bf16.msra.mxu0 %v829
  %847 = vmatprep.subr.bf16.mxu0 0
  %848 = vmatpush2.bf16.msra.mxu0 0
  %849 = vmatprep.subr.bf16.mxu0 0
  %850 = vmatpush2.bf16.msra.mxu0 0
  %851 = vmatprep.subr.bf16.mxu0 0
  %852 = vmatpush2.bf16.msra.mxu0 0
  %853 = vmatprep.subr.bf16.mxu0 0
  %854 = vmatpush2.bf16.msra.mxu0 0
  %855 = vmatprep.subr.bf16.mxu0 0
  %856 = vmatpush2.bf16.msra.mxu0 0
  %857 = vmatprep.subr.bf16.mxu0 0
  %858 = vmatpush2.bf16.msra.mxu0 0
  %859 = vmatprep.subr.bf16.mxu0 0
  %860 = vmatpush2.bf16.msra.mxu0 0
  %861 = vmatprep.subr.bf16.mxu0 0
  %862 = vmatpush2.bf16.msra.mxu0 0
  %863 = vmatprep.mubr.bf16.mxu0 0
  %864 = vmatmul.mubr.bf16.gmra.mxu0 %v826
  %v865 = vpop.f32.mrf.mxu0
  %v866 = vadd.f32 0.0, %v865
  %v867 = vpop.f32.mrf.mxu0
  %v868 = vpop.f32.mrf.mxu0
  %v869 = vpop.f32.mrf.mxu0
  %870 = vdwg.mxu0
  %v872 = vsel %vm83, %v547, 0
  %v875 = vsel %vm551, %v68, 0
  %877 = vmatprep.subr.bf16.mxu0 0
  %878 = vmatpush1.bf16.msra.mxu0 0
  %879 = vmatprep.subr.bf16.mxu0 0
  %880 = vmatpush1.bf16.msra.mxu0 0
  %881 = vmatprep.subr.bf16.mxu0 0
  %882 = vmatpush1.bf16.msra.mxu0 0
  %883 = vmatprep.subr.bf16.mxu0 0
  %884 = vmatpush1.bf16.msra.mxu0 0
  %885 = vmatprep.subr.bf16.mxu0 0
  %886 = vmatpush1.bf16.msra.mxu0 0
  %887 = vmatprep.subr.bf16.mxu0 0
  %888 = vmatpush1.bf16.msra.mxu0 0
  %889 = vmatprep.subr.bf16.mxu0 0
  %890 = vmatpush1.bf16.msra.mxu0 0
  %891 = vmatprep.subr.bf16.mxu0 0
  %892 = vmatpush1.bf16.msra.mxu0 %v875
  %893 = vmatprep.subr.bf16.mxu0 0
  %894 = vmatpush2.bf16.msra.mxu0 0
  %895 = vmatprep.subr.bf16.mxu0 0
  %896 = vmatpush2.bf16.msra.mxu0 0
  %897 = vmatprep.subr.bf16.mxu0 0
  %898 = vmatpush2.bf16.msra.mxu0 0
  %899 = vmatprep.subr.bf16.mxu0 0
  %900 = vmatpush2.bf16.msra.mxu0 0
  %901 = vmatprep.subr.bf16.mxu0 0
  %902 = vmatpush2.bf16.msra.mxu0 0
  %903 = vmatprep.subr.bf16.mxu0 0
  %904 = vmatpush2.bf16.msra.mxu0 0
  %905 = vmatprep.subr.bf16.mxu0 0
  %906 = vmatpush2.bf16.msra.mxu0 0
  %907 = vmatprep.subr.bf16.mxu0 0
  %908 = vmatpush2.bf16.msra.mxu0 0
  %909 = vmatprep.mubr.bf16.mxu0 0
  %910 = vmatmul.mubr.bf16.gmra.mxu0 %v872
  %v911 = vpop.f32.mrf.mxu0
  %v912 = vadd.f32 0.0, %v911
  %v913 = vpop.f32.mrf.mxu0
  %v914 = vpop.f32.mrf.mxu0
  %v915 = vpop.f32.mrf.mxu0
  %916 = vdwg.mxu0
  %917 = vst.msk [vmem:[%s5] sm:$0xff] %vm83, %v590
  %918 = vst.msk [vmem:[%s5 + $0x8] sm:$0xff] %vm83, %v636
  %919 = vst.msk [vmem:[%s5 + $0x10] sm:$0xff] %vm83, %v682
  %920 = vst.msk [vmem:[%s5 + $0x18] sm:$0xff] %vm83, %v728
  %921 = vst.msk [vmem:[%s5 + $0x20] sm:$0xff] %vm83, %v774
  %922 = vst.msk [vmem:[%s5 + $0x28] sm:$0xff] %vm83, %v820
  %923 = vst.msk [vmem:[%s5 + $0x30] sm:$0xff] %vm83, %v866
  %924 = vst.msk [vmem:[%s5 + $0x38] sm:$0xff] %vm83, %v912
  // Predicated region
  $region22: #{t5_loss.12} parent=0 // pred_check
    _
  $region23: #{t5_loss.12} parent=0 // pred_check_branch
    %926 = sbr.rel (0) target = $region25
  $region24: #{t5_loss.12} parent=0 // pred_region
    _
  $region25: #{t5_loss.12} parent=0 // pred_fallthru
    _
  // Predicated region
  $region26: #{t5_loss.12} parent=0 // pred_check
    _
  $region27: #{t5_loss.12} parent=0 // pred_check_branch
    %928 = sbr.rel (0) target = $region29
  $region28: #{t5_loss.12} parent=0 // pred_region
    _
  $region29: #{t5_loss.12} parent=0 // pred_fallthru
    _

// kernel: t5_loss.10
$region0: #{t5_loss.10}
  #allocation0 [shape = 'u32[]', space=smem, size = 0x4, offset = 0x4, fixed_abs, tag = 'smem constant byte address 0x4 - core index']
  #allocation1 [shape = 'u32[144,128]{1,0:T(1,128)}', space=vmem, size = 0x12000, scoped, tag = 'internal scratch']
  %s0 = inlined_call_operand.vmem [shape: f32[16,32], index: 0, kind: input, shape index: {}]
  %s1 = inlined_call_operand.vmem [shape: bf16[32,32], index: 1, kind: input, shape index: {}]
  %s2 = inlined_call_operand.vmem [shape: f32[16,32], index: 2, kind: input, shape index: {}]
  %s3 = inlined_call_operand.vmem [shape: f32[1,32], index: 3, kind: input, shape index: {}]
  %s4 = inlined_call_operand.vmem [shape: bf16[32,128], index: 4, kind: input, shape index: {}]
  %s5 = inlined_call_operand.vmem [shape: bf16[64,32], index: 5, kind: input, shape index: {}]
  %s6 = inlined_call_operand.vmem [shape: f32[1,32], index: 6, kind: input, shape index: {}]
  %s7 = inlined_call_operand.vmem [shape: bf16[32,64], index: 7, kind: input, shape index: {}]
  %s8 = inlined_call_operand.vmem [shape: f32[16,64], index: 8, kind: output, shape index: {}]
  %s9 = sld [smem:[#allocation0]]
  $region42: #{t5_loss.10} parent=0
    _
  %s11 = ssub.s32 1, %s9
  %s12 = scalar_select 0, %s11, %s9
  // Predicated region
  $region2: #{t5_loss.10} parent=0 // pred_check
    _
  $region3: #{t5_loss.10} parent=0 // pred_check_branch
    %14 = sbr.rel (0) target = $region5
  $region4: #{t5_loss.10} parent=0 // pred_region
    _
  $region5: #{t5_loss.10} parent=0 // pred_fallthru
    _
  // Predicated region
  $region6: #{t5_loss.10} parent=0 // pred_check
    _
  $region7: #{t5_loss.10} parent=0 // pred_check_branch
    %16 = sbr.rel (0) target = $region9
  $region8: #{t5_loss.10} parent=0 // pred_region
    _
  $region9: #{t5_loss.10} parent=0 // pred_fallthru
    _
  // Predicated region
  $region10: #{t5_loss.10} parent=0 // pred_check
    _
  $region11: #{t5_loss.10} parent=0 // pred_check_branch
    %18 = sbr.rel (0) target = $region13
  $region12: #{t5_loss.10} parent=0 // pred_region
    _
  $region13: #{t5_loss.10} parent=0 // pred_fallthru
    _
  // Predicated region
  $region14: #{t5_loss.10} parent=0 // pred_check
    _
  $region15: #{t5_loss.10} parent=0 // pred_check_branch
    %20 = sbr.rel (0) target = $region17
  $region16: #{t5_loss.10} parent=0 // pred_region
    _
  $region17: #{t5_loss.10} parent=0 // pred_fallthru
    _
  // Predicated region
  $region18: #{t5_loss.10} parent=0 // pred_check
    _
  $region19: #{t5_loss.10} parent=0 // pred_check_branch
    %22 = sbr.rel (0) target = $region21
  $region20: #{t5_loss.10} parent=0 // pred_region
    _
  $region21: #{t5_loss.10} parent=0 // pred_fallthru
    _
  // Predicated region
  $region22: #{t5_loss.10} parent=0 // pred_check
    _
  $region23: #{t5_loss.10} parent=0 // pred_check_branch
    %24 = sbr.rel (0) target = $region25
  $region24: #{t5_loss.10} parent=0 // pred_region
    _
  $region25: #{t5_loss.10} parent=0 // pred_fallthru
    _
  // Predicated region
  $region26: #{t5_loss.10} parent=0 // pred_check
    _
  $region27: #{t5_loss.10} parent=0 // pred_check_branch
    %26 = sbr.rel (0) target = $region29
  $region28: #{t5_loss.10} parent=0 // pred_region
    _
  $region29: #{t5_loss.10} parent=0 // pred_fallthru
    _
  // Predicated region
  $region30: #{t5_loss.10} parent=0 // pred_check
    _
  $region31: #{t5_loss.10} parent=0 // pred_check_branch
    %28 = sbr.rel (0) target = $region33
  $region32: #{t5_loss.10} parent=0 // pred_region
    _
  $region33: #{t5_loss.10} parent=0 // pred_fallthru
    _
  %v30 = vld [vmem:[%s0] sm:$0xff]
  %v31 = vld [vmem:[%s0 + $0x8] sm:$0xff]
  %v32 = vld [vmem:[%s1] sm:$0xf]
  %v33 = vld [vmem:[%s1 + $0x4] sm:$0xf]
  %v34 = vld [vmem:[%s1 + $0x8] sm:$0xf]
  %v35 = vld [vmem:[%s1 + $0xc] sm:$0xf]
  %v36 = vld [vmem:[%s2] sm:$0xff]
  %v37 = vld [vmem:[%s2 + $0x8] sm:$0xff]
  %v38 = vpack.c.bf16 %v31, %v30
  %v43 = vunpack.c.l.b16 %v32
  %v44 = vunpack.c.l.b16 %v33
  %v45 = vunpack.c.l.b16 %v34
  %v46 = vunpack.c.l.b16 %v35
  %v47 = vpack.c.b16 %v44, %v43
  %v48 = vpack.c.b16 %v46, %v45
  %vm51 = vcmask 261120
  %v53 = vsel %vm51, %v38, 0
  %55 = vmatprep.subr.bf16.mxu0 0
  %56 = vmatpush1.bf16.msra.mxu0 0
  %57 = vmatprep.subr.bf16.mxu0 0
  %58 = vmatpush1.bf16.msra.mxu0 0
  %59 = vmatprep.subr.bf16.mxu0 0
  %60 = vmatpush1.bf16.msra.mxu0 0
  %61 = vmatprep.subr.bf16.mxu0 0
  %62 = vmatpush1.bf16.msra.mxu0 0
  %63 = vmatprep.subr.bf16.mxu0 0
  %64 = vmatpush1.bf16.msra.mxu0 0
  %65 = vmatprep.subr.bf16.mxu0 0
  %66 = vmatpush1.bf16.msra.mxu0 0
  %67 = vmatprep.subr.bf16.mxu0 0
  %68 = vmatpush1.bf16.msra.mxu0 %v48
  %69 = vmatprep.subr.bf16.mxu0 0
  %70 = vmatpush1.bf16.msra.mxu0 %v47
  %71 = vmatprep.subr.bf16.mxu0 0
  %72 = vmatpush2.bf16.msra.mxu0 0
  %73 = vmatprep.subr.bf16.mxu0 0
  %74 = vmatpush2.bf16.msra.mxu0 0
  %75 = vmatprep.subr.bf16.mxu0 0
  %76 = vmatpush2.bf16.msra.mxu0 0
  %77 = vmatprep.subr.bf16.mxu0 0
  %78 = vmatpush2.bf16.msra.mxu0 0
  %79 = vmatprep.subr.bf16.mxu0 0
  %80 = vmatpush2.bf16.msra.mxu0 0
  %81 = vmatprep.subr.bf16.mxu0 0
  %82 = vmatpush2.bf16.msra.mxu0 0
  %83 = vmatprep.subr.bf16.mxu0 0
  %84 = vmatpush2.bf16.msra.mxu0 0
  %85 = vmatprep.subr.bf16.mxu0 0
  %86 = vmatpush2.bf16.msra.mxu0 0
  %87 = vmatprep.mubr.bf16.mxu0 0
  %88 = vmatmul.mubr.bf16.gmra.mxu0 %v53
  %v89 = vpop.f32.mrf.mxu0
  %v90 = vadd.f32 0.0, %v89
  %v91 = vpop.f32.mrf.mxu0
  %v92 = vpop.f32.mrf.mxu0
  %v93 = vadd.f32 0.0, %v92
  %v94 = vpop.f32.mrf.mxu0
  %95 = vdwg.mxu0
  %v96 = vadd.f32 %v36, %v90
  %v97 = vadd.f32 %v37, %v93
  %v98 = vld [vmem:[%s3] sm:$0x1]
  %v99 = vld [vmem:[%s4] sm:$0xf]
  %v100 = vld [vmem:[%s4 + $0x4] sm:$0xf]
  %v101 = vld [vmem:[%s4 + $0x8] sm:$0xf]
  %v102 = vld [vmem:[%s4 + $0xc] sm:$0xf]
  %v103 = vld [vmem:[%s5] sm:$0xf]
  %v104 = vld [vmem:[%s5 + $0x4] sm:$0xf]
  %v105 = vld [vmem:[%s5 + $0x8] sm:$0xf]
  %v106 = vld [vmem:[%s5 + $0xc] sm:$0xf]
  %v107 = vld [vmem:[%s5 + $0x10] sm:$0xf]
  %v108 = vld [vmem:[%s5 + $0x14] sm:$0xf]
  %v109 = vld [vmem:[%s5 + $0x18] sm:$0xf]
  %v110 = vld [vmem:[%s5 + $0x1c] sm:$0xf]
  %v111 = vmul.f32 %v96, %v96
  %v112 = vmul.f32 %v97, %v97
  %v113 = vsel %vm51, %v111, 0.0
  %114 = vadd.xlane.f32.xlu0 %v113
  %v115 = vpop.xlane.xlu0 %114
  %v116 = vsel %vm51, %v112, 0.0
  %117 = vadd.xlane.f32.xlu0 %v116
  %v118 = vpop.xlane.xlu0 %117
  %v119 = vrcp.pop 32.0
  %v120 = vmul.f32 %v115, %v119
  %v121 = vmul.f32 %v118, %v119
  %v122 = vadd.f32 %v120, 1e-06
  %v123 = vadd.f32 %v121, 1e-06
  %v124 = vrsqrt.pop %v122
  %v125 = vrsqrt.pop %v123
  %v126 = vmul.f32 %v96, %v124
  %v127 = vmul.f32 %v97, %v125
  %v129 = vlaneseq
  %v130 = vshrl.u32 %v129, 7
  %v131 = vsub.s32 0, %v130
  %v132 = vrot.slane %v98, %v131
  %v134 = vmul.f32 %v126, %v132
  %v135 = vmul.f32 %v127, %v132
  %v136 = vpack.c.bf16 %v135, %v134
  %v141 = vunpack.c.l.b16 %v99
  %v142 = vunpack.c.l.b16 %v100
  %v143 = vunpack.c.l.b16 %v101
  %v144 = vunpack.c.l.b16 %v102
  %v145 = vpack.c.b16 %v142, %v141
  %v146 = vpack.c.b16 %v144, %v143
  %v150 = vsel %vm51, %v136, 0
  %152 = vmatprep.subr.bf16.mxu0 0
  %153 = vmatpush1.bf16.msra.mxu0 0
  %154 = vmatprep.subr.bf16.mxu0 0
  %155 = vmatpush1.bf16.msra.mxu0 0
  %156 = vmatprep.subr.bf16.mxu0 0
  %157 = vmatpush1.bf16.msra.mxu0 0
  %158 = vmatprep.subr.bf16.mxu0 0
  %159 = vmatpush1.bf16.msra.mxu0 0
  %160 = vmatprep.subr.bf16.mxu0 0
  %161 = vmatpush1.bf16.msra.mxu0 0
  %162 = vmatprep.subr.bf16.mxu0 0
  %163 = vmatpush1.bf16.msra.mxu0 0
  %164 = vmatprep.subr.bf16.mxu0 0
  %165 = vmatpush1.bf16.msra.mxu0 %v146
  %166 = vmatprep.subr.bf16.mxu0 0
  %167 = vmatpush1.bf16.msra.mxu0 %v145
  %168 = vmatprep.subr.bf16.mxu0 0
  %169 = vmatpush2.bf16.msra.mxu0 0
  %170 = vmatprep.subr.bf16.mxu0 0
  %171 = vmatpush2.bf16.msra.mxu0 0
  %172 = vmatprep.subr.bf16.mxu0 0
  %173 = vmatpush2.bf16.msra.mxu0 0
  %174 = vmatprep.subr.bf16.mxu0 0
  %175 = vmatpush2.bf16.msra.mxu0 0
  %176 = vmatprep.subr.bf16.mxu0 0
  %177 = vmatpush2.bf16.msra.mxu0 0
  %178 = vmatprep.subr.bf16.mxu0 0
  %179 = vmatpush2.bf16.msra.mxu0 0
  %180 = vmatprep.subr.bf16.mxu0 0
  %181 = vmatpush2.bf16.msra.mxu0 0
  %182 = vmatprep.subr.bf16.mxu0 0
  %183 = vmatpush2.bf16.msra.mxu0 0
  %184 = vmatprep.mubr.bf16.mxu0 0
  %185 = vmatmul.mubr.bf16.gmra.mxu0 %v150
  %v186 = vpop.f32.mrf.mxu0
  %v187 = vadd.f32 0.0, %v186
  %v188 = vpop.f32.mrf.mxu0
  %v189 = vpop.f32.mrf.mxu0
  %v190 = vadd.f32 0.0, %v189
  %v191 = vpop.f32.mrf.mxu0
  %192 = vdwg.mxu0
  %v193 = vmul.f32 %v187, %v187
  %v194 = vmul.f32 %v190, %v190
  %v195 = vmul.f32 %v187, %v193
  %v196 = vmul.f32 %v190, %v194
  %v197 = vmul.f32 %v195, 0.044715
  %v198 = vmul.f32 %v196, 0.044715
  %v199 = vadd.f32 %v187, %v197
  %v200 = vadd.f32 %v190, %v198
  %v201 = vmul.f32 %v199, 0.7978846
  %v202 = vmul.f32 %v200, 0.7978846
  %v203 = vtanh.pop %v201
  %v204 = vtanh.pop %v202
  %v205 = vadd.f32 %v203, 1.0
  %v206 = vadd.f32 %v204, 1.0
  %v207 = vmul.f32 %v205, 0.5
  %v208 = vmul.f32 %v206, 0.5
  %v209 = vmul.f32 %v187, %v207
  %v210 = vmul.f32 %v190, %v208
  %213 = vrot.lane.b32.xlu0 %v187, 64
  %v214 = vpop.permute.xlu0 %213
  %215 = vrot.lane.b32.xlu0 %v190, 64
  %v216 = vpop.permute.xlu0 %215
  %v219 = vmul.f32 %v209, %v214
  %v220 = vmul.f32 %v210, %v216
  %v221 = vpack.c.bf16 %v220, %v219
  %v230 = vunpack.c.l.b16 %v103
  %v231 = vunpack.c.l.b16 %v104
  %v232 = vunpack.c.l.b16 %v105
  %v233 = vunpack.c.l.b16 %v106
  %v234 = vunpack.c.l.b16 %v107
  %v235 = vunpack.c.l.b16 %v108
  %v236 = vunpack.c.l.b16 %v109
  %v237 = vunpack.c.l.b16 %v110
  %v238 = vpack.c.b16 %v231, %v230
  %v239 = vpack.c.b16 %v233, %v232
  %v240 = vpack.c.b16 %v235, %v234
  %v241 = vpack.c.b16 %v237, %v236
  %vm246 = vcmask 523264
  %v248 = vsel %vm246, %v221, 0
  %250 = vmatprep.subr.bf16.mxu0 0
  %251 = vmatpush1.bf16.msra.mxu0 0
  %252 = vmatprep.subr.bf16.mxu0 0
  %253 = vmatpush1.bf16.msra.mxu0 0
  %254 = vmatprep.subr.bf16.mxu0 0
  %255 = vmatpush1.bf16.msra.mxu0 0
  %256 = vmatprep.subr.bf16.mxu0 0
  %257 = vmatpush1.bf16.msra.mxu0 0
  %258 = vmatprep.subr.bf16.mxu0 0
  %259 = vmatpush1.bf16.msra.mxu0 %v241
  %260 = vmatprep.subr.bf16.mxu0 0
  %261 = vmatpush1.bf16.msra.mxu0 %v240
  %262 = vmatprep.subr.bf16.mxu0 0
  %263 = vmatpush1.bf16.msra.mxu0 %v239
  %264 = vmatprep.subr.bf16.mxu0 0
  %265 = vmatpush1.bf16.msra.mxu0 %v238
  %266 = vmatprep.subr.bf16.mxu0 0
  %267 = vmatpush2.bf16.msra.mxu0 0
  %268 = vmatprep.subr.bf16.mxu0 0
  %269 = vmatpush2.bf16.msra.mxu0 0
  %270 = vmatprep.subr.bf16.mxu0 0
  %271 = vmatpush2.bf16.msra.mxu0 0
  %272 = vmatprep.subr.bf16.mxu0 0
  %273 = vmatpush2.bf16.msra.mxu0 0
  %274 = vmatprep.subr.bf16.mxu0 0
  %275 = vmatpush2.bf16.msra.mxu0 0
  %276 = vmatprep.subr.bf16.mxu0 0
  %277 = vmatpush2.bf16.msra.mxu0 0
  %278 = vmatprep.subr.bf16.mxu0 0
  %279 = vmatpush2.bf16.msra.mxu0 0
  %280 = vmatprep.subr.bf16.mxu0 0
  %281 = vmatpush2.bf16.msra.mxu0 0
  %282 = vmatprep.mubr.bf16.mxu0 0
  %283 = vmatmul.mubr.bf16.gmra.mxu0 %v248
  %v284 = vpop.f32.mrf.mxu0
  %v285 = vadd.f32 0.0, %v284
  %v286 = vpop.f32.mrf.mxu0
  %v287 = vpop.f32.mrf.mxu0
  %v288 = vadd.f32 0.0, %v287
  %v289 = vpop.f32.mrf.mxu0
  %290 = vdwg.mxu0
  %v291 = vadd.f32 %v96, %v285
  %v292 = vadd.f32 %v97, %v288
  %v293 = vld [vmem:[%s6] sm:$0x1]
  %v294 = vmul.f32 %v291, %v291
  %v295 = vmul.f32 %v292, %v292
  %v296 = vsel %vm51, %v294, 0.0
  %297 = vadd.xlane.f32.xlu0 %v296
  %v298 = vpop.xlane.xlu0 %297
  %v299 = vsel %vm51, %v295, 0.0
  %300 = vadd.xlane.f32.xlu0 %v299
  %v301 = vpop.xlane.xlu0 %300
  %v302 = vmul.f32 %v298, %v119
  %v303 = vmul.f32 %v301, %v119
  %v304 = vadd.f32 %v302, 1e-06
  %v305 = vadd.f32 %v303, 1e-06
  %v306 = vrsqrt.pop %v304
  %v307 = vrsqrt.pop %v305
  %v308 = vmul.f32 %v291, %v306
  %v309 = vmul.f32 %v292, %v307
  %v311 = vlaneseq
  %v312 = vshrl.u32 %v311, 7
  %v313 = vsub.s32 0, %v312
  %v314 = vrot.slane %v293, %v313
  %v316 = vmul.f32 %v308, %v314
  %v317 = vmul.f32 %v309, %v314
  %v318 = vpack.c.bf16 %v317, %v316
  %v319 = vld [vmem:[%s7] sm:$0xf]
  %v320 = vld [vmem:[%s7 + $0x4] sm:$0xf]
  %v321 = vld [vmem:[%s7 + $0x8] sm:$0xf]
  %v322 = vld [vmem:[%s7 + $0xc] sm:$0xf]
  %v327 = vunpack.c.l.b16 %v319
  %v328 = vunpack.c.l.b16 %v320
  %v329 = vunpack.c.l.b16 %v321
  %v330 = vunpack.c.l.b16 %v322
  %v331 = vpack.c.b16 %v328, %v327
  %v332 = vpack.c.b16 %v330, %v329
  %v336 = vsel %vm51, %v318, 0
  %338 = vmatprep.subr.bf16.mxu0 0
  %339 = vmatpush1.bf16.msra.mxu0 0
  %340 = vmatprep.subr.bf16.mxu0 0
  %341 = vmatpush1.bf16.msra.mxu0 0
  %342 = vmatprep.subr.bf16.mxu0 0
  %343 = vmatpush1.bf16.msra.mxu0 0
  %344 = vmatprep.subr.bf16.mxu0 0
  %345 = vmatpush1.bf16.msra.mxu0 0
  %346 = vmatprep.subr.bf16.mxu0 0
  %347 = vmatpush1.bf16.msra.mxu0 0
  %348 = vmatprep.subr.bf16.mxu0 0
  %349 = vmatpush1.bf16.msra.mxu0 0
  %350 = vmatprep.subr.bf16.mxu0 0
  %351 = vmatpush1.bf16.msra.mxu0 %v332
  %352 = vmatprep.subr.bf16.mxu0 0
  %353 = vmatpush1.bf16.msra.mxu0 %v331
  %354 = vmatprep.subr.bf16.mxu0 0
  %355 = vmatpush2.bf16.msra.mxu0 0
  %356 = vmatprep.subr.bf16.mxu0 0
  %357 = vmatpush2.bf16.msra.mxu0 0
  %358 = vmatprep.subr.bf16.mxu0 0
  %359 = vmatpush2.bf16.msra.mxu0 0
  %360 = vmatprep.subr.bf16.mxu0 0
  %361 = vmatpush2.bf16.msra.mxu0 0
  %362 = vmatprep.subr.bf16.mxu0 0
  %363 = vmatpush2.bf16.msra.mxu0 0
  %364 = vmatprep.subr.bf16.mxu0 0
  %365 = vmatpush2.bf16.msra.mxu0 0
  %366 = vmatprep.subr.bf16.mxu0 0
  %367 = vmatpush2.bf16.msra.mxu0 0
  %368 = vmatprep.subr.bf16.mxu0 0
  %369 = vmatpush2.bf16.msra.mxu0 0
  %370 = vmatprep.mubr.bf16.mxu0 0
  %371 = vmatmul.mubr.bf16.gmra.mxu0 %v336
  %v372 = vpop.f32.mrf.mxu0
  %v373 = vadd.f32 0.0, %v372
  %v374 = vpop.f32.mrf.mxu0
  %v375 = vpop.f32.mrf.mxu0
  %v376 = vadd.f32 0.0, %v375
  %v377 = vpop.f32.mrf.mxu0
  %378 = vdwg.mxu0
  %379 = vst.msk [vmem:[%s8] sm:$0xff] %vm246, %v373
  %380 = vst.msk [vmem:[%s8 + $0x8] sm:$0xff] %vm246, %v376
  // Predicated region
  $region34: #{t5_loss.10} parent=0 // pred_check
    _
  $region35: #{t5_loss.10} parent=0 // pred_check_branch
    %382 = sbr.rel (0) target = $region37
  $region36: #{t5_loss.10} parent=0 // pred_region
    _
  $region37: #{t5_loss.10} parent=0 // pred_fallthru
    _
  // Predicated region
  $region38: #{t5_loss.10} parent=0 // pred_check
    _
  $region39: #{t5_loss.10} parent=0 // pred_check_branch
    %384 = sbr.rel (0) target = $region41
  $region40: #{t5_loss.10} parent=0 // pred_region
    _
  $region41: #{t5_loss.10} parent=0 // pred_fallthru
    _

// kernel: t5_loss.15
$region0: #{t5_loss.15}
  #allocation0 [shape = 'u32[]', space=smem, size = 0x4, offset = 0x4, fixed_abs, tag = 'smem constant byte address 0x4 - core index']
  #allocation1 [shape = 'u32[144,128]{1,0:T(1,128)}', space=vmem, size = 0x12000, scoped, tag = 'internal scratch']
  %s0 = inlined_call_operand.vmem [shape: f32[16,32], index: 0, kind: input, shape index: {}]
  %s1 = inlined_call_operand.vmem [shape: bf16[32,32], index: 1, kind: input, shape index: {}]
  %s2 = inlined_call_operand.vmem [shape: f32[16,32], index: 2, kind: input, shape index: {}]
  %s3 = inlined_call_operand.vmem [shape: f32[1,32], index: 3, kind: input, shape index: {}]
  %s4 = inlined_call_operand.vmem [shape: bf16[32,128], index: 4, kind: input, shape index: {}]
  %s5 = inlined_call_operand.vmem [shape: bf16[64,32], index: 5, kind: input, shape index: {}]
  %s6 = inlined_call_operand.vmem [shape: f32[1,32], index: 6, kind: input, shape index: {}]
  %s7 = inlined_call_operand.vmem [shape: bf16[32,64], index: 7, kind: input, shape index: {}]
  %s8 = inlined_call_operand.vmem [shape: s32[16,1], index: 8, kind: input, shape index: {}]
  %s9 = inlined_call_operand.hbm [shape: f32[1,1], index: 9, kind: output, shape index: {0}]
  %s10 = inlined_call_operand.hbm [shape: f32[1,1], index: 10, kind: output, shape index: {1}]
  %11 = xla_tuple %s9, %s10
  %s12 = sld [smem:[#allocation0]]
  $region54: #{t5_loss.15} parent=0
    _
  %s14 = ssub.s32 1, %s12
  %s15 = scalar_select 0, %s14, %s12
  $region1: #{t5_loss.15} parent=0
    #allocation2 [shape = 'u8[512]{0}', space=smem, size = 0x200, scoped, tag = 'output window, operand 0, single buffered']
    #allocation3 [shape = 's32[1]{0}', space=sflag, size = 0x4, scoped, tag = 'scoped memory for t5_loss.15']
    #allocation4 [shape = 'u8[512]{0}', space=smem, size = 0x200, scoped, tag = 'output window, operand 1, single buffered']
    #allocation5 [shape = 's32[1]{0}', space=sflag, size = 0x4, scoped, tag = 'scoped memory for t5_loss.15']
    %16 = vsyncpa [#allocation3], 0
    %17 = vsyncpa [#allocation5], 0
    // Predicated region
    $region2: #{t5_loss.15} parent=1 // pred_check
      _
    $region3: #{t5_loss.15} parent=1 // pred_check_branch
      %19 = sbr.rel (0) target = $region5
    $region4: #{t5_loss.15} parent=1 // pred_region
      _
    $region5: #{t5_loss.15} parent=1 // pred_fallthru
      _
    // Predicated region
    $region6: #{t5_loss.15} parent=1 // pred_check
      _
    $region7: #{t5_loss.15} parent=1 // pred_check_branch
      %21 = sbr.rel (0) target = $region9
    $region8: #{t5_loss.15} parent=1 // pred_region
      _
    $region9: #{t5_loss.15} parent=1 // pred_fallthru
      _
    // Predicated region
    $region10: #{t5_loss.15} parent=1 // pred_check
      _
    $region11: #{t5_loss.15} parent=1 // pred_check_branch
      %23 = sbr.rel (0) target = $region13
    $region12: #{t5_loss.15} parent=1 // pred_region
      _
    $region13: #{t5_loss.15} parent=1 // pred_fallthru
      _
    // Predicated region
    $region14: #{t5_loss.15} parent=1 // pred_check
      _
    $region15: #{t5_loss.15} parent=1 // pred_check_branch
      %25 = sbr.rel (0) target = $region17
    $region16: #{t5_loss.15} parent=1 // pred_region
      _
    $region17: #{t5_loss.15} parent=1 // pred_fallthru
      _
    // Predicated region
    $region18: #{t5_loss.15} parent=1 // pred_check
      _
    $region19: #{t5_loss.15} parent=1 // pred_check_branch
      %27 = sbr.rel (0) target = $region21
    $region20: #{t5_loss.15} parent=1 // pred_region
      _
    $region21: #{t5_loss.15} parent=1 // pred_fallthru
      _
    // Predicated region
    $region22: #{t5_loss.15} parent=1 // pred_check
      _
    $region23: #{t5_loss.15} parent=1 // pred_check_branch
      %29 = sbr.rel (0) target = $region25
    $region24: #{t5_loss.15} parent=1 // pred_region
      _
    $region25: #{t5_loss.15} parent=1 // pred_fallthru
      _
    // Predicated region
    $region26: #{t5_loss.15} parent=1 // pred_check
      _
    $region27: #{t5_loss.15} parent=1 // pred_check_branch
      %31 = sbr.rel (0) target = $region29
    $region28: #{t5_loss.15} parent=1 // pred_region
      _
    $region29: #{t5_loss.15} parent=1 // pred_fallthru
      _
    // Predicated region
    $region30: #{t5_loss.15} parent=1 // pred_check
      _
    $region31: #{t5_loss.15} parent=1 // pred_check_branch
      %33 = sbr.rel (0) target = $region33
    $region32: #{t5_loss.15} parent=1 // pred_region
      _
    $region33: #{t5_loss.15} parent=1 // pred_fallthru
      _
    // Predicated region
    $region34: #{t5_loss.15} parent=1 // pred_check
      _
    $region35: #{t5_loss.15} parent=1 // pred_check_branch
      %35 = sbr.rel (0) target = $region37
    $region36: #{t5_loss.15} parent=1 // pred_region
      _
    $region37: #{t5_loss.15} parent=1 // pred_fallthru
      _
    %v37 = vld [vmem:[%s0] sm:$0xff]
    %v38 = vld [vmem:[%s0 + $0x8] sm:$0xff]
    %v39 = vld [vmem:[%s1] sm:$0xf]
    %v40 = vld [vmem:[%s1 + $0x4] sm:$0xf]
    %v41 = vld [vmem:[%s1 + $0x8] sm:$0xf]
    %v42 = vld [vmem:[%s1 + $0xc] sm:$0xf]
    %v43 = vld [vmem:[%s2] sm:$0xff]
    %v44 = vld [vmem:[%s2 + $0x8] sm:$0xff]
    %v45 = vpack.c.bf16 %v38, %v37
    %v50 = vunpack.c.l.b16 %v39
    %v51 = vunpack.c.l.b16 %v40
    %v52 = vunpack.c.l.b16 %v41
    %v53 = vunpack.c.l.b16 %v42
    %v54 = vpack.c.b16 %v51, %v50
    %v55 = vpack.c.b16 %v53, %v52
    %vm58 = vcmask 261120
    %v60 = vsel %vm58, %v45, 0
    %62 = vmatprep.subr.bf16.mxu0 0
    %63 = vmatpush1.bf16.msra.mxu0 0
    %64 = vmatprep.subr.bf16.mxu0 0
    %65 = vmatpush1.bf16.msra.mxu0 0
    %66 = vmatprep.subr.bf16.mxu0 0
    %67 = vmatpush1.bf16.msra.mxu0 0
    %68 = vmatprep.subr.bf16.mxu0 0
    %69 = vmatpush1.bf16.msra.mxu0 0
    %70 = vmatprep.subr.bf16.mxu0 0
    %71 = vmatpush1.bf16.msra.mxu0 0
    %72 = vmatprep.subr.bf16.mxu0 0
    %73 = vmatpush1.bf16.msra.mxu0 0
    %74 = vmatprep.subr.bf16.mxu0 0
    %75 = vmatpush1.bf16.msra.mxu0 %v55
    %76 = vmatprep.subr.bf16.mxu0 0
    %77 = vmatpush1.bf16.msra.mxu0 %v54
    %78 = vmatprep.subr.bf16.mxu0 0
    %79 = vmatpush2.bf16.msra.mxu0 0
    %80 = vmatprep.subr.bf16.mxu0 0
    %81 = vmatpush2.bf16.msra.mxu0 0
    %82 = vmatprep.subr.bf16.mxu0 0
    %83 = vmatpush2.bf16.msra.mxu0 0
    %84 = vmatprep.subr.bf16.mxu0 0
    %85 = vmatpush2.bf16.msra.mxu0 0
    %86 = vmatprep.subr.bf16.mxu0 0
    %87 = vmatpush2.bf16.msra.mxu0 0
    %88 = vmatprep.subr.bf16.mxu0 0
    %89 = vmatpush2.bf16.msra.mxu0 0
    %90 = vmatprep.subr.bf16.mxu0 0
    %91 = vmatpush2.bf16.msra.mxu0 0
    %92 = vmatprep.subr.bf16.mxu0 0
    %93 = vmatpush2.bf16.msra.mxu0 0
    %94 = vmatprep.mubr.bf16.mxu0 0
    %95 = vmatmul.mubr.bf16.gmra.mxu0 %v60
    %v96 = vpop.f32.mrf.mxu0
    %v97 = vadd.f32 0.0, %v96
    %v98 = vpop.f32.mrf.mxu0
    %v99 = vpop.f32.mrf.mxu0
    %v100 = vadd.f32 0.0, %v99
    %v101 = vpop.f32.mrf.mxu0
    %102 = vdwg.mxu0
    %v103 = vadd.f32 %v43, %v97
    %v104 = vadd.f32 %v44, %v100
    %v105 = vld [vmem:[%s3] sm:$0x1]
    %v106 = vld [vmem:[%s4] sm:$0xf]
    %v107 = vld [vmem:[%s4 + $0x4] sm:$0xf]
    %v108 = vld [vmem:[%s4 + $0x8] sm:$0xf]
    %v109 = vld [vmem:[%s4 + $0xc] sm:$0xf]
    %v110 = vld [vmem:[%s5] sm:$0xf]
    %v111 = vld [vmem:[%s5 + $0x4] sm:$0xf]
    %v112 = vld [vmem:[%s5 + $0x8] sm:$0xf]
    %v113 = vld [vmem:[%s5 + $0xc] sm:$0xf]
    %v114 = vld [vmem:[%s5 + $0x10] sm:$0xf]
    %v115 = vld [vmem:[%s5 + $0x14] sm:$0xf]
    %v116 = vld [vmem:[%s5 + $0x18] sm:$0xf]
    %v117 = vld [vmem:[%s5 + $0x1c] sm:$0xf]
    %v118 = vmul.f32 %v103, %v103
    %v119 = vmul.f32 %v104, %v104
    %v120 = vsel %vm58, %v118, 0.0
    %121 = vadd.xlane.f32.xlu0 %v120
    %v122 = vpop.xlane.xlu0 %121
    %v123 = vsel %vm58, %v119, 0.0
    %124 = vadd.xlane.f32.xlu0 %v123
    %v125 = vpop.xlane.xlu0 %124
    %v126 = vrcp.pop 32.0
    %v127 = vmul.f32 %v122, %v126
    %v128 = vmul.f32 %v125, %v126
    %v129 = vadd.f32 %v127, 1e-06
    %v130 = vadd.f32 %v128, 1e-06
    %v131 = vrsqrt.pop %v129
    %v132 = vrsqrt.pop %v130
    %v133 = vmul.f32 %v103, %v131
    %v134 = vmul.f32 %v104, %v132
    %v136 = vlaneseq
    %v137 = vshrl.u32 %v136, 7
    %v138 = vsub.s32 0, %v137
    %v139 = vrot.slane %v105, %v138
    %v141 = vmul.f32 %v133, %v139
    %v142 = vmul.f32 %v134, %v139
    %v143 = vpack.c.bf16 %v142, %v141
    %v148 = vunpack.c.l.b16 %v106
    %v149 = vunpack.c.l.b16 %v107
    %v150 = vunpack.c.l.b16 %v108
    %v151 = vunpack.c.l.b16 %v109
    %v152 = vpack.c.b16 %v149, %v148
    %v153 = vpack.c.b16 %v151, %v150
    %v157 = vsel %vm58, %v143, 0
    %159 = vmatprep.subr.bf16.mxu0 0
    %160 = vmatpush1.bf16.msra.mxu0 0
    %161 = vmatprep.subr.bf16.mxu0 0
    %162 = vmatpush1.bf16.msra.mxu0 0
    %163 = vmatprep.subr.bf16.mxu0 0
    %164 = vmatpush1.bf16.msra.mxu0 0
    %165 = vmatprep.subr.bf16.mxu0 0
    %166 = vmatpush1.bf16.msra.mxu0 0
    %167 = vmatprep.subr.bf16.mxu0 0
    %168 = vmatpush1.bf16.msra.mxu0 0
    %169 = vmatprep.subr.bf16.mxu0 0
    %170 = vmatpush1.bf16.msra.mxu0 0
    %171 = vmatprep.subr.bf16.mxu0 0
    %172 = vmatpush1.bf16.msra.mxu0 %v153
    %173 = vmatprep.subr.bf16.mxu0 0
    %174 = vmatpush1.bf16.msra.mxu0 %v152
    %175 = vmatprep.subr.bf16.mxu0 0
    %176 = vmatpush2.bf16.msra.mxu0 0
    %177 = vmatprep.subr.bf16.mxu0 0
    %178 = vmatpush2.bf16.msra.mxu0 0
    %179 = vmatprep.subr.bf16.mxu0 0
    %180 = vmatpush2.bf16.msra.mxu0 0
    %181 = vmatprep.subr.bf16.mxu0 0
    %182 = vmatpush2.bf16.msra.mxu0 0
    %183 = vmatprep.subr.bf16.mxu0 0
    %184 = vmatpush2.bf16.msra.mxu0 0
    %185 = vmatprep.subr.bf16.mxu0 0
    %186 = vmatpush2.bf16.msra.mxu0 0
    %187 = vmatprep.subr.bf16.mxu0 0
    %188 = vmatpush2.bf16.msra.mxu0 0
    %189 = vmatprep.subr.bf16.mxu0 0
    %190 = vmatpush2.bf16.msra.mxu0 0
    %191 = vmatprep.mubr.bf16.mxu0 0
    %192 = vmatmul.mubr.bf16.gmra.mxu0 %v157
    %v193 = vpop.f32.mrf.mxu0
    %v194 = vadd.f32 0.0, %v193
    %v195 = vpop.f32.mrf.mxu0
    %v196 = vpop.f32.mrf.mxu0
    %v197 = vadd.f32 0.0, %v196
    %v198 = vpop.f32.mrf.mxu0
    %199 = vdwg.mxu0
    %v200 = vmul.f32 %v194, %v194
    %v201 = vmul.f32 %v197, %v197
    %v202 = vmul.f32 %v194, %v200
    %v203 = vmul.f32 %v197, %v201
    %v204 = vmul.f32 %v202, 0.044715
    %v205 = vmul.f32 %v203, 0.044715
    %v206 = vadd.f32 %v194, %v204
    %v207 = vadd.f32 %v197, %v205
    %v208 = vmul.f32 %v206, 0.7978846
    %v209 = vmul.f32 %v207, 0.7978846
    %v210 = vtanh.pop %v208
    %v211 = vtanh.pop %v209
    %v212 = vadd.f32 %v210, 1.0
    %v213 = vadd.f32 %v211, 1.0
    %v214 = vmul.f32 %v212, 0.5
    %v215 = vmul.f32 %v213, 0.5
    %v216 = vmul.f32 %v194, %v214
    %v217 = vmul.f32 %v197, %v215
    %220 = vrot.lane.b32.xlu0 %v194, 64
    %v221 = vpop.permute.xlu0 %220
    %222 = vrot.lane.b32.xlu0 %v197, 64
    %v223 = vpop.permute.xlu0 %222
    %v226 = vmul.f32 %v216, %v221
    %v227 = vmul.f32 %v217, %v223
    %v228 = vpack.c.bf16 %v227, %v226
    %v237 = vunpack.c.l.b16 %v110
    %v238 = vunpack.c.l.b16 %v111
    %v239 = vunpack.c.l.b16 %v112
    %v240 = vunpack.c.l.b16 %v113
    %v241 = vunpack.c.l.b16 %v114
    %v242 = vunpack.c.l.b16 %v115
    %v243 = vunpack.c.l.b16 %v116
    %v244 = vunpack.c.l.b16 %v117
    %v245 = vpack.c.b16 %v238, %v237
    %v246 = vpack.c.b16 %v240, %v239
    %v247 = vpack.c.b16 %v242, %v241
    %v248 = vpack.c.b16 %v244, %v243
    %vm253 = vcmask 523264
    %v255 = vsel %vm253, %v228, 0
    %257 = vmatprep.subr.bf16.mxu0 0
    %258 = vmatpush1.bf16.msra.mxu0 0
    %259 = vmatprep.subr.bf16.mxu0 0
    %260 = vmatpush1.bf16.msra.mxu0 0
    %261 = vmatprep.subr.bf16.mxu0 0
    %262 = vmatpush1.bf16.msra.mxu0 0
    %263 = vmatprep.subr.bf16.mxu0 0
    %264 = vmatpush1.bf16.msra.mxu0 0
    %265 = vmatprep.subr.bf16.mxu0 0
    %266 = vmatpush1.bf16.msra.mxu0 %v248
    %267 = vmatprep.subr.bf16.mxu0 0
    %268 = vmatpush1.bf16.msra.mxu0 %v247
    %269 = vmatprep.subr.bf16.mxu0 0
    %270 = vmatpush1.bf16.msra.mxu0 %v246
    %271 = vmatprep.subr.bf16.mxu0 0
    %272 = vmatpush1.bf16.msra.mxu0 %v245
    %273 = vmatprep.subr.bf16.mxu0 0
    %274 = vmatpush2.bf16.msra.mxu0 0
    %275 = vmatprep.subr.bf16.mxu0 0
    %276 = vmatpush2.bf16.msra.mxu0 0
    %277 = vmatprep.subr.bf16.mxu0 0
    %278 = vmatpush2.bf16.msra.mxu0 0
    %279 = vmatprep.subr.bf16.mxu0 0
    %280 = vmatpush2.bf16.msra.mxu0 0
    %281 = vmatprep.subr.bf16.mxu0 0
    %282 = vmatpush2.bf16.msra.mxu0 0
    %283 = vmatprep.subr.bf16.mxu0 0
    %284 = vmatpush2.bf16.msra.mxu0 0
    %285 = vmatprep.subr.bf16.mxu0 0
    %286 = vmatpush2.bf16.msra.mxu0 0
    %287 = vmatprep.subr.bf16.mxu0 0
    %288 = vmatpush2.bf16.msra.mxu0 0
    %289 = vmatprep.mubr.bf16.mxu0 0
    %290 = vmatmul.mubr.bf16.gmra.mxu0 %v255
    %v291 = vpop.f32.mrf.mxu0
    %v292 = vadd.f32 0.0, %v291
    %v293 = vpop.f32.mrf.mxu0
    %v294 = vpop.f32.mrf.mxu0
    %v295 = vadd.f32 0.0, %v294
    %v296 = vpop.f32.mrf.mxu0
    %297 = vdwg.mxu0
    %v298 = vadd.f32 %v103, %v292
    %v299 = vadd.f32 %v104, %v295
    %v300 = vld [vmem:[%s6] sm:$0x1]
    %v301 = vmul.f32 %v298, %v298
    %v302 = vmul.f32 %v299, %v299
    %v303 = vsel %vm58, %v301, 0.0
    %304 = vadd.xlane.f32.xlu0 %v303
    %v305 = vpop.xlane.xlu0 %304
    %v306 = vsel %vm58, %v302, 0.0
    %307 = vadd.xlane.f32.xlu0 %v306
    %v308 = vpop.xlane.xlu0 %307
    %v309 = vmul.f32 %v305, %v126
    %v310 = vmul.f32 %v308, %v126
    %v311 = vadd.f32 %v309, 1e-06
    %v312 = vadd.f32 %v310, 1e-06
    %v313 = vrsqrt.pop %v311
    %v314 = vrsqrt.pop %v312
    %v315 = vmul.f32 %v298, %v313
    %v316 = vmul.f32 %v299, %v314
    %v318 = vlaneseq
    %v319 = vshrl.u32 %v318, 7
    %v320 = vsub.s32 0, %v319
    %v321 = vrot.slane %v300, %v320
    %v323 = vmul.f32 %v315, %v321
    %v324 = vmul.f32 %v316, %v321
    %v325 = vpack.c.bf16 %v324, %v323
    %v326 = vld [vmem:[%s7] sm:$0xf]
    %v327 = vld [vmem:[%s7 + $0x4] sm:$0xf]
    %v328 = vld [vmem:[%s7 + $0x8] sm:$0xf]
    %v329 = vld [vmem:[%s7 + $0xc] sm:$0xf]
    %v334 = vunpack.c.l.b16 %v326
    %v335 = vunpack.c.l.b16 %v327
    %v336 = vunpack.c.l.b16 %v328
    %v337 = vunpack.c.l.b16 %v329
    %v338 = vpack.c.b16 %v335, %v334
    %v339 = vpack.c.b16 %v337, %v336
    %v343 = vsel %vm58, %v325, 0
    %345 = vmatprep.subr.bf16.mxu0 0
    %346 = vmatpush1.bf16.msra.mxu0 0
    %347 = vmatprep.subr.bf16.mxu0 0
    %348 = vmatpush1.bf16.msra.mxu0 0
    %349 = vmatprep.subr.bf16.mxu0 0
    %350 = vmatpush1.bf16.msra.mxu0 0
    %351 = vmatprep.subr.bf16.mxu0 0
    %352 = vmatpush1.bf16.msra.mxu0 0
    %353 = vmatprep.subr.bf16.mxu0 0
    %354 = vmatpush1.bf16.msra.mxu0 0
    %355 = vmatprep.subr.bf16.mxu0 0
    %356 = vmatpush1.bf16.msra.mxu0 0
    %357 = vmatprep.subr.bf16.mxu0 0
    %358 = vmatpush1.bf16.msra.mxu0 %v339
    %359 = vmatprep.subr.bf16.mxu0 0
    %360 = vmatpush1.bf16.msra.mxu0 %v338
    %361 = vmatprep.subr.bf16.mxu0 0
    %362 = vmatpush2.bf16.msra.mxu0 0
    %363 = vmatprep.subr.bf16.mxu0 0
    %364 = vmatpush2.bf16.msra.mxu0 0
    %365 = vmatprep.subr.bf16.mxu0 0
    %366 = vmatpush2.bf16.msra.mxu0 0
    %367 = vmatprep.subr.bf16.mxu0 0
    %368 = vmatpush2.bf16.msra.mxu0 0
    %369 = vmatprep.subr.bf16.mxu0 0
    %370 = vmatpush2.bf16.msra.mxu0 0
    %371 = vmatprep.subr.bf16.mxu0 0
    %372 = vmatpush2.bf16.msra.mxu0 0
    %373 = vmatprep.subr.bf16.mxu0 0
    %374 = vmatpush2.bf16.msra.mxu0 0
    %375 = vmatprep.subr.bf16.mxu0 0
    %376 = vmatpush2.bf16.msra.mxu0 0
    %377 = vmatprep.mubr.bf16.mxu0 0
    %378 = vmatmul.mubr.bf16.gmra.mxu0 %v343
    %v379 = vpop.f32.mrf.mxu0
    %v380 = vadd.f32 0.0, %v379
    %v381 = vpop.f32.mrf.mxu0
    %v382 = vpop.f32.mrf.mxu0
    %v383 = vadd.f32 0.0, %v382
    %v384 = vpop.f32.mrf.mxu0
    %385 = vdwg.mxu0
    %v386 = vld [vmem:[%s8] sm:$0xff]
    %v387 = vld [vmem:[%s8 + $0x8] sm:$0xff]
    %v388 = vsel %vm253, %v380, -inf
    %389 = vmax.xlane.f32.xlu0 %v388
    %v390 = vpop.xlane.xlu0 %389
    %v391 = vsel %vm253, %v383, -inf
    %392 = vmax.xlane.f32.xlu0 %v391
    %v393 = vpop.xlane.xlu0 %392
    %v394 = vsub.f32 %v380, %v390
    %v395 = vsub.f32 %v383, %v393
    %v396 = vmul.f32 %v394, 1.442695
    %v397 = vpow.pop %v396
    %v398 = vmul.f32 %v395, 1.442695
    %v399 = vpow.pop %v398
    %v400 = vsel %vm253, %v397, 0.0
    %401 = vadd.xlane.f32.xlu0 %v400
    %v402 = vpop.xlane.xlu0 %401
    %v403 = vsel %vm253, %v399, 0.0
    %404 = vadd.xlane.f32.xlu0 %v403
    %v405 = vpop.xlane.xlu0 %404
    %v406 = vlog2.pop %v402
    %v407 = vmul.f32 %v406, 0.6931472
    %v408 = vlog2.pop %v405
    %v409 = vmul.f32 %v408, 0.6931472
    %v410 = vadd.f32 %v407, %v390
    %v411 = vadd.f32 %v409, %v393
    %v412 = vlaneseq
    %v413 = vand.u32 %v412, 127
    %414 = vset.pattern.permute.xlu0 0
    %415 = vperm.xlu0 %414, %v386
    %v416 = vpop.permute.xlu0 %415
    %417 = vset.pattern.permute.xlu0 0
    %418 = vperm.xlu0 %417, %v387
    %v419 = vpop.permute.xlu0 %418
    %vm420 = vcmp.eq.s32.totalorder %v413, %v416
    %vm421 = vcmp.eq.s32.totalorder %v413, %v419
    %v422 = vsel %vm420, 1, 0
    %v423 = vsel %vm421, 1, 0
    %v424 = vcvt.s32.f32 %v422
    %v425 = vcvt.s32.f32 %v423
    %v426 = vmul.f32 %v380, %v424
    %v427 = vmul.f32 %v383, %v425
    %v428 = vsel %vm253, %v426, 0.0
    %429 = vadd.xlane.f32.xlu0 %v428
    %v430 = vpop.xlane.xlu0 %429
    %v431 = vsel %vm253, %v427, 0.0
    %432 = vadd.xlane.f32.xlu0 %v431
    %v433 = vpop.xlane.xlu0 %432
    %vm434 = vcmp.ne.s32.totalorder %v386, 4294967196
    %vm435 = vcmp.ne.s32.totalorder %v387, 4294967196
    %v436 = vsel %vm434, 1, 0
    %v437 = vsel %vm435, 1, 0
    %v438 = vcvt.s32.f32 %v436
    %v439 = vcvt.s32.f32 %v437
    %v440 = vsub.f32 %v410, %v430
    %v441 = vsub.f32 %v411, %v433
    %v442 = vmul.f32 %v440, %v438
    %v443 = vmul.f32 %v441, %v439
    %vm444 = vcmask 7168
    %v445 = vsel %vm444, %v442, 0.0
    %v446 = vsel %vm444, %v443, 0.0
    %v447 = vadd.f32 %v445, %v446
    %448 = vadd.xlane.f32.xlu0 %v447
    %v449 = vpop.xlane.xlu0 %448
    %v450 = vrot.slane %v449, 4
    %v451 = vadd.f32 %v449, %v450
    %v452 = vrot.slane %v451, 2
    %v453 = vadd.f32 %v451, %v452
    %v454 = vrot.slane %v453, 1
    %v455 = vadd.f32 %v453, %v454
    %s456 = vtos %v455
    %s457 = scalar_lea.smem [#allocation2], 0
    %458 = sst [smem:[%s457]] %s456
    %v459 = vsel %vm444, %v438, 0.0
    %v460 = vsel %vm444, %v439, 0.0
    %v461 = vadd.f32 %v459, %v460
    %462 = vadd.xlane.f32.xlu0 %v461
    %v463 = vpop.xlane.xlu0 %462
    %v464 = vrot.slane %v463, 4
    %v465 = vadd.f32 %v463, %v464
    %v466 = vrot.slane %v465, 2
    %v467 = vadd.f32 %v465, %v466
    %v468 = vrot.slane %v467, 1
    %v469 = vadd.f32 %v467, %v468
    %s470 = vtos %v469
    %s471 = scalar_lea.smem [#allocation4], 0
    %472 = sst [smem:[%s471]] %s470
    // Predicated region
    $region38: #{t5_loss.15} parent=1 // pred_check
      _
    $region39: #{t5_loss.15} parent=1 // pred_check_branch
      %474 = sbr.rel (0) target = $region41
    $region40: #{t5_loss.15} parent=1 // pred_region
      %s476 = ssub.s32 16, 16
      %477 = vsyncadd [#allocation3], %s476
      %480 = dma.smem_to_hbm [#allocation2], 16, %s9, [#allocation3]
    $region41: #{t5_loss.15} parent=1 // pred_fallthru
      _
    // Predicated region
    $region42: #{t5_loss.15} parent=1 // pred_check
      _
    $region43: #{t5_loss.15} parent=1 // pred_check_branch
      %482 = sbr.rel (0) target = $region45
    $region44: #{t5_loss.15} parent=1 // pred_region
      %s484 = ssub.s32 16, 16
      %485 = vsyncadd [#allocation5], %s484
      %488 = dma.smem_to_hbm [#allocation4], 16, %s10, [#allocation5]
    $region45: #{t5_loss.15} parent=1 // pred_fallthru
      _
    // Predicated region
    $region46: #{t5_loss.15} parent=1 // pred_check
      _
    $region47: #{t5_loss.15} parent=1 // pred_check_branch
      %490 = sbr.rel (0) target = $region49
    $region48: #{t5_loss.15} parent=1 // pred_region
      %491 = dma.done [#allocation3], 16
    $region49: #{t5_loss.15} parent=1 // pred_fallthru
      _
    // Predicated region
    $region50: #{t5_loss.15} parent=1 // pred_check
      _
    $region51: #{t5_loss.15} parent=1 // pred_check_branch
      %493 = sbr.rel (0) target = $region53
    $region52: #{t5_loss.15} parent=1 // pred_region
      %494 = dma.done [#allocation5], 16
    $region53: #{t5_loss.15} parent=1 // pred_fallthru
      _
    %495 = sfence
    %496 = vsyncpa [#allocation3], 1
    %497 = vsyncpa [#allocation5], 1

</llo_original>
